<compile_context>
chip_gen: v7x
topology: tpu7x:2x2x1
jax: 0.10.0
libtpu: 0.0.40
codegen_flags: <defaults>
</compile_context>

<pallas_src>
import functools

import jax
import jax.numpy as jnp
import numpy as np
from jax import lax
from jax.experimental import pallas as pl
from jax.experimental.pallas import tpu as pltpu

_LN_EPS = 1e-5  # PyTorch nn.LayerNorm default


def _layer_norm(h, gamma, beta):
    """LayerNorm over the last axis in f32; rsqrt goes to the EUP slot."""
    mu = jnp.mean(h, axis=-1, keepdims=True)
    hc = h - mu
    var = jnp.mean(hc * hc, axis=-1, keepdims=True)
    inv = lax.rsqrt(var + _LN_EPS)
    return hc * inv * gamma + beta


def single_input_embedding_kernel(x_ref, w1_ref, w2_ref, w3_ref, p_ref, o_ref,
                                  *, c1, c2):
    # x_ref : [BN, Cin]        bf16 row tile of flattened inputs
    # wX_ref: [Cprev, Cx]      bf16 linear weights (pre-transposed: h = x @ W)
    # p_ref : [9, Cout]        f32 slab: rows = b1,g1,be1, b2,g2,be2, b3,g3,be3
    #                          (each zero-padded on lanes to Cout)
    # o_ref : [BN, Cout]
    x = x_ref[...]
    p = p_ref[...]

    # Stage 1: Linear -> LayerNorm -> ReLU   (f32 accumulate out of the MXU)
    h = jnp.dot(x, w1_ref[...], preferred_element_type=jnp.float32)
    h = h + p[0:1, :c1]
    h = jnp.maximum(_layer_norm(h, p[1:2, :c1], p[2:3, :c1]), 0.0)

    # Stage 2: Linear -> LayerNorm -> ReLU
    h = jnp.dot(h.astype(w2_ref.dtype), w2_ref[...],
                preferred_element_type=jnp.float32)
    h = h + p[3:4, :c2]
    h = jnp.maximum(_layer_norm(h, p[4:5, :c2], p[5:6, :c2]), 0.0)

    # Stage 3: Linear -> LayerNorm (no ReLU)
    h = jnp.dot(h.astype(w3_ref.dtype), w3_ref[...],
                preferred_element_type=jnp.float32)
    h = h + p[6:7, :]
    o_ref[...] = _layer_norm(h, p[7:8, :], p[8:9, :]).astype(o_ref.dtype)


@functools.partial(jax.jit, static_argnames=("block_rows", "out_dtype"))
def single_input_embedding_forward(x, params, *, block_rows=512, out_dtype=None):
    """x: [..., in_channel] -> [..., out_channel]."""
    lead = x.shape[:-1]
    in_channel = x.shape[-1]
    c1 = params["W1"].shape[1]
    c2 = params["W2"].shape[1]
    out_channel = params["W3"].shape[1]
    if out_dtype is None:
        out_dtype = x.dtype

    n_rows = 1
    for d in lead:
        n_rows *= int(d)

    # Row tile: full array if it fits in one block (any size is then legal),
    # otherwise an 8-aligned tile; ragged last block is masked by Pallas.
    if n_rows <= block_rows:
        bn = n_rows
    else:
        bn = max(8, (block_rows // 8) * 8)
    n_blocks = pl.cdiv(n_rows, bn)

    # bf16 MXU inputs (f32 accumulate inside the kernel).
    xf = x.reshape(n_rows, in_channel).astype(jnp.bfloat16)
    w1 = params["W1"].astype(jnp.bfloat16)
    w2 = params["W2"].astype(jnp.bfloat16)
    w3 = params["W3"].astype(jnp.bfloat16)

    # Pack the 9 bias / gamma / beta vectors into one f32 [9, Cout] slab.
    def _padded_row(v):
        v = v.astype(jnp.float32).reshape(-1)
        return jnp.pad(v, (0, out_channel - v.shape[0]))

    pslab = jnp.stack(
        [_padded_row(params[k]) for k in
         ("b1", "g1", "beta1", "b2", "g2", "beta2", "b3", "g3", "beta3")],
        axis=0)

    # VMEM budget: double-buffered x/out tiles + weights + param slab +
    # f32 intermediates; only raise the scoped limit if we exceed the 32 MiB
    # default (keeps the small-tile path identical everywhere, incl. v7x).
    out_itemsize = jnp.dtype(out_dtype).itemsize
    est = 2 * bn * in_channel * 2
    est += 2 * bn * out_channel * out_itemsize
    est += 2 * (in_channel * c1 + c1 * c2 + c2 * out_channel) * 2
    est += 2 * 16 * out_channel * 4
    est += 2 * bn * (c1 + c2 + out_channel) * 4
    est = int(est * 1.25) + (1 << 20)
    cp_kwargs = dict(dimension_semantics=("parallel",))
    if est > (32 << 20):
        cp_kwargs["vmem_limit_bytes"] = est

    out = pl.pallas_call(
        functools.partial(single_input_embedding_kernel, c1=c1, c2=c2),
        out_shape=jax.ShapeDtypeStruct((n_rows, out_channel), out_dtype),
        grid=(n_blocks,),
        in_specs=[
            pl.BlockSpec((bn, in_channel), lambda i: (i, 0)),      # x tile
            pl.BlockSpec((in_channel, c1), lambda i: (0, 0)),      # W1
            pl.BlockSpec((c1, c2), lambda i: (0, 0)),              # W2
            pl.BlockSpec((c2, out_channel), lambda i: (0, 0)),     # W3
            pl.BlockSpec((9, out_channel), lambda i: (0, 0)),      # bias/LN slab
        ],
        out_specs=pl.BlockSpec((bn, out_channel), lambda i: (i, 0)),
        compiler_params=pltpu.CompilerParams(**cp_kwargs),
    )(xf, w1, w2, w3, pslab)

    return out.reshape(*lead, out_channel)


def single_input_embedding_ref(x, params):
    """Pure-JAX (f32) mirror of the PyTorch SingleInputEmbedding.forward."""
    def ln(h, g, b):
        mu = h.mean(-1, keepdims=True)
        var = ((h - mu) ** 2).mean(-1, keepdims=True)
        return (h - mu) / jnp.sqrt(var + _LN_EPS) * g + b

    h = x @ params["W1"] + params["b1"]
    h = jax.nn.relu(ln(h, params["g1"], params["beta1"]))
    h = h @ params["W2"] + params["b2"]
    h = jax.nn.relu(ln(h, params["g2"], params["beta2"]))
    h = h @ params["W3"] + params["b3"]
    return ln(h, params["g3"], params["beta3"])


if __name__ == "__main__":
    # Small but TPU-friendly shapes:
    #   in_channel = 4, out_channel = 128  (-> hidden 32, 64; lane-dense output)
    #   x: [2, 256, 4] -> 512 rows -> grid of 2 steps with block_rows = 256,
    #   so the "parallel" axis can shard across both TCs on v7x.
    in_channel = 4
    out_channel = 128
    c1, c2 = out_channel // 4, out_channel // 2
    batch, seq = 2, 256

    key = jax.random.PRNGKey(0)
    ks = jax.random.split(key, 13)
    f32 = jnp.float32
    params = {
        "W1":    (jax.random.normal(ks[0], (in_channel, c1)) * 0.2).astype(f32),
        "b1":    (jax.random.normal(ks[1], (c1,)) * 0.1).astype(f32),
        "g1":    (1.0 + 0.1 * jax.random.normal(ks[2], (c1,))).astype(f32),
        "beta1": (jax.random.normal(ks[3], (c1,)) * 0.1).astype(f32),
        "W2":    (jax.random.normal(ks[4], (c1, c2)) * 0.2).astype(f32),
        "b2":    (jax.random.normal(ks[5], (c2,)) * 0.1).astype(f32),
        "g2":    (1.0 + 0.1 * jax.random.normal(ks[6], (c2,))).astype(f32),
        "beta2": (jax.random.normal(ks[7], (c2,)) * 0.1).astype(f32),
        "W3":    (jax.random.normal(ks[8], (c2, out_channel)) * 0.2).astype(f32),
        "b3":    (jax.random.normal(ks[9], (out_channel,)) * 0.1).astype(f32),
        "g3":    (1.0 + 0.1 * jax.random.normal(ks[10], (out_channel,))).astype(f32),
        "beta3": (jax.random.normal(ks[11], (out_channel,)) * 0.1).astype(f32),
    }
    x = jax.random.normal(ks[12], (batch, seq, in_channel)).astype(f32)

    out = single_input_embedding_forward(x, params, block_rows=256)
    out = jax.block_until_ready(out)

    ref = jax.block_until_ready(single_input_embedding_ref(x, params))
    assert out.shape == (batch, seq, out_channel)
    # bf16 MXU inputs (f32 accumulate + f32 LayerNorm) => bf16-level tolerance
    # against the pure-f32 reference.
    np.testing.assert_allclose(np.asarray(out, dtype=np.float32),
                               np.asarray(ref, dtype=np.float32),
                               rtol=5e-2, atol=5e-2)
    print("KERNEL_OK")
</pallas_src>

<mosaic_0001>
module attributes {stable_mosaic.version = 11 : i64} {
  func.func @single_input_embedding_kernel(%arg0: i32, %arg1: memref<256x4xbf16, #tpu.memory_space<vmem>>, %arg2: memref<4x32xbf16, #tpu.memory_space<vmem>>, %arg3: memref<32x64xbf16, #tpu.memory_space<vmem>>, %arg4: memref<64x128xbf16, #tpu.memory_space<vmem>>, %arg5: memref<9x128xf32, #tpu.memory_space<vmem>>, %arg6: memref<256x128xf32, #tpu.memory_space<vmem>>) attributes {dimension_semantics = [#tpu.dimension_semantics<parallel>], iteration_bounds = array<i64: 2>, scalar_prefetch = 0 : i64, scratch_operands = 0 : i64, tpu.core_type = #tpu.core_type<tc>, window_params = [{transform_indices = @transform_0, window_bounds = array<i64: 256, 4>}, {pipeline_mode = #tpu.pipeline_mode<synchronous>, transform_indices = @transform_1, window_bounds = array<i64: 4, 32>}, {pipeline_mode = #tpu.pipeline_mode<synchronous>, transform_indices = @transform_2, window_bounds = array<i64: 32, 64>}, {pipeline_mode = #tpu.pipeline_mode<synchronous>, transform_indices = @transform_3, window_bounds = array<i64: 64, 128>}, {pipeline_mode = #tpu.pipeline_mode<synchronous>, transform_indices = @transform_4, window_bounds = array<i64: 9, 128>}, {transform_indices = @transform_5, window_bounds = array<i64: 256, 128>}]} {
    %c0 = arith.constant 0 : index
    %c0_0 = arith.constant 0 : index
    %0 = vector.load %arg1[%c0, %c0_0] : memref<256x4xbf16, #tpu.memory_space<vmem>>, vector<256x4xbf16>
    %c0_1 = arith.constant 0 : index
    %c0_2 = arith.constant 0 : index
    %1 = vector.load %arg5[%c0_1, %c0_2] : memref<9x128xf32, #tpu.memory_space<vmem>>, vector<9x128xf32>
    %c0_3 = arith.constant 0 : index
    %c0_4 = arith.constant 0 : index
    %2 = vector.load %arg2[%c0_3, %c0_4] : memref<4x32xbf16, #tpu.memory_space<vmem>>, vector<4x32xbf16>
    %cst = arith.constant dense<0.000000e+00> : vector<256x32xf32>
    %3 = tpu.matmul %0, %2, %cst {dimension_numbers = #tpu.dot_dimension_numbers<[1], [0], [0], [1], [0, 0, 1, 1], [], []>} : vector<256x4xbf16>, vector<4x32xbf16>, vector<256x32xf32> -> vector<256x32xf32>
    %4 = vector.extract_strided_slice %1 {offsets = [0, 0], sizes = [1, 32], strides = [1, 1]} : vector<9x128xf32> to vector<1x32xf32>
    %5 = vector.broadcast %4 : vector<1x32xf32> to vector<256x32xf32>
    %6 = arith.addf %3, %5 : vector<256x32xf32>
    %7 = vector.extract_strided_slice %1 {offsets = [1, 0], sizes = [1, 32], strides = [1, 1]} : vector<9x128xf32> to vector<1x32xf32>
    %8 = vector.extract_strided_slice %1 {offsets = [2, 0], sizes = [1, 32], strides = [1, 1]} : vector<9x128xf32> to vector<1x32xf32>
    %cst_5 = arith.constant dense<0.000000e+00> : vector<256xf32>
    %9 = vector.multi_reduction <add>, %6, %cst_5 [1] : vector<256x32xf32> to vector<256xf32>
    %10 = vector.shape_cast %9 : vector<256xf32> to vector<256x1xf32>
    %cst_6 = arith.constant 3.200000e+01 : f32
    %11 = vector.broadcast %cst_6 : f32 to vector<256x1xf32>
    %12 = arith.divf %10, %11 : vector<256x1xf32>
    %13 = vector.broadcast %12 : vector<256x1xf32> to vector<256x32xf32>
    %14 = arith.subf %6, %13 : vector<256x32xf32>
    %15 = arith.mulf %14, %14 : vector<256x32xf32>
    %cst_7 = arith.constant dense<0.000000e+00> : vector<256xf32>
    %16 = vector.multi_reduction <add>, %15, %cst_7 [1] : vector<256x32xf32> to vector<256xf32>
    %17 = vector.shape_cast %16 : vector<256xf32> to vector<256x1xf32>
    %cst_8 = arith.constant 3.200000e+01 : f32
    %18 = vector.broadcast %cst_8 : f32 to vector<256x1xf32>
    %19 = arith.divf %17, %18 : vector<256x1xf32>
    %cst_9 = arith.constant 9.99999974E-6 : f32
    %20 = vector.broadcast %cst_9 : f32 to vector<256x1xf32>
    %21 = arith.addf %19, %20 : vector<256x1xf32>
    %22 = math.rsqrt %21 : vector<256x1xf32>
    %23 = vector.broadcast %22 : vector<256x1xf32> to vector<256x32xf32>
    %24 = arith.mulf %14, %23 : vector<256x32xf32>
    %25 = vector.broadcast %7 : vector<1x32xf32> to vector<256x32xf32>
    %26 = arith.mulf %24, %25 : vector<256x32xf32>
    %27 = vector.broadcast %8 : vector<1x32xf32> to vector<256x32xf32>
    %28 = arith.addf %26, %27 : vector<256x32xf32>
    %cst_10 = arith.constant 0.000000e+00 : f32
    %29 = vector.broadcast %cst_10 : f32 to vector<256x32xf32>
    %30 = arith.maximumf %28, %29 : vector<256x32xf32>
    %31 = arith.truncf %30 : vector<256x32xf32> to vector<256x32xbf16>
    %c0_11 = arith.constant 0 : index
    %c0_12 = arith.constant 0 : index
    %32 = vector.load %arg3[%c0_11, %c0_12] : memref<32x64xbf16, #tpu.memory_space<vmem>>, vector<32x64xbf16>
    %cst_13 = arith.constant dense<0.000000e+00> : vector<256x64xf32>
    %33 = tpu.matmul %31, %32, %cst_13 {dimension_numbers = #tpu.dot_dimension_numbers<[1], [0], [0], [1], [0, 0, 1, 1], [], []>} : vector<256x32xbf16>, vector<32x64xbf16>, vector<256x64xf32> -> vector<256x64xf32>
    %34 = vector.extract_strided_slice %1 {offsets = [3, 0], sizes = [1, 64], strides = [1, 1]} : vector<9x128xf32> to vector<1x64xf32>
    %35 = vector.broadcast %34 : vector<1x64xf32> to vector<256x64xf32>
    %36 = arith.addf %33, %35 : vector<256x64xf32>
    %37 = vector.extract_strided_slice %1 {offsets = [4, 0], sizes = [1, 64], strides = [1, 1]} : vector<9x128xf32> to vector<1x64xf32>
    %38 = vector.extract_strided_slice %1 {offsets = [5, 0], sizes = [1, 64], strides = [1, 1]} : vector<9x128xf32> to vector<1x64xf32>
    %cst_14 = arith.constant dense<0.000000e+00> : vector<256xf32>
    %39 = vector.multi_reduction <add>, %36, %cst_14 [1] : vector<256x64xf32> to vector<256xf32>
    %40 = vector.shape_cast %39 : vector<256xf32> to vector<256x1xf32>
    %cst_15 = arith.constant 6.400000e+01 : f32
    %41 = vector.broadcast %cst_15 : f32 to vector<256x1xf32>
    %42 = arith.divf %40, %41 : vector<256x1xf32>
    %43 = vector.broadcast %42 : vector<256x1xf32> to vector<256x64xf32>
    %44 = arith.subf %36, %43 : vector<256x64xf32>
    %45 = arith.mulf %44, %44 : vector<256x64xf32>
    %cst_16 = arith.constant dense<0.000000e+00> : vector<256xf32>
    %46 = vector.multi_reduction <add>, %45, %cst_16 [1] : vector<256x64xf32> to vector<256xf32>
    %47 = vector.shape_cast %46 : vector<256xf32> to vector<256x1xf32>
    %cst_17 = arith.constant 6.400000e+01 : f32
    %48 = vector.broadcast %cst_17 : f32 to vector<256x1xf32>
    %49 = arith.divf %47, %48 : vector<256x1xf32>
    %cst_18 = arith.constant 9.99999974E-6 : f32
    %50 = vector.broadcast %cst_18 : f32 to vector<256x1xf32>
    %51 = arith.addf %49, %50 : vector<256x1xf32>
    %52 = math.rsqrt %51 : vector<256x1xf32>
    %53 = vector.broadcast %52 : vector<256x1xf32> to vector<256x64xf32>
    %54 = arith.mulf %44, %53 : vector<256x64xf32>
    %55 = vector.broadcast %37 : vector<1x64xf32> to vector<256x64xf32>
    %56 = arith.mulf %54, %55 : vector<256x64xf32>
    %57 = vector.broadcast %38 : vector<1x64xf32> to vector<256x64xf32>
    %58 = arith.addf %56, %57 : vector<256x64xf32>
    %cst_19 = arith.constant 0.000000e+00 : f32
    %59 = vector.broadcast %cst_19 : f32 to vector<256x64xf32>
    %60 = arith.maximumf %58, %59 : vector<256x64xf32>
    %61 = arith.truncf %60 : vector<256x64xf32> to vector<256x64xbf16>
    %c0_20 = arith.constant 0 : index
    %c0_21 = arith.constant 0 : index
    %62 = vector.load %arg4[%c0_20, %c0_21] : memref<64x128xbf16, #tpu.memory_space<vmem>>, vector<64x128xbf16>
    %cst_22 = arith.constant dense<0.000000e+00> : vector<256x128xf32>
    %63 = tpu.matmul %61, %62, %cst_22 {dimension_numbers = #tpu.dot_dimension_numbers<[1], [0], [0], [1], [0, 0, 1, 1], [], []>} : vector<256x64xbf16>, vector<64x128xbf16>, vector<256x128xf32> -> vector<256x128xf32>
    %64 = vector.extract_strided_slice %1 {offsets = [6, 0], sizes = [1, 128], strides = [1, 1]} : vector<9x128xf32> to vector<1x128xf32>
    %65 = vector.broadcast %64 : vector<1x128xf32> to vector<256x128xf32>
    %66 = arith.addf %63, %65 : vector<256x128xf32>
    %67 = vector.extract_strided_slice %1 {offsets = [7, 0], sizes = [1, 128], strides = [1, 1]} : vector<9x128xf32> to vector<1x128xf32>
    %68 = vector.extract_strided_slice %1 {offsets = [8, 0], sizes = [1, 128], strides = [1, 1]} : vector<9x128xf32> to vector<1x128xf32>
    %cst_23 = arith.constant dense<0.000000e+00> : vector<256xf32>
    %69 = vector.multi_reduction <add>, %66, %cst_23 [1] : vector<256x128xf32> to vector<256xf32>
    %70 = vector.shape_cast %69 : vector<256xf32> to vector<256x1xf32>
    %cst_24 = arith.constant 1.280000e+02 : f32
    %71 = vector.broadcast %cst_24 : f32 to vector<256x1xf32>
    %72 = arith.divf %70, %71 : vector<256x1xf32>
    %73 = vector.broadcast %72 : vector<256x1xf32> to vector<256x128xf32>
    %74 = arith.subf %66, %73 : vector<256x128xf32>
    %75 = arith.mulf %74, %74 : vector<256x128xf32>
    %cst_25 = arith.constant dense<0.000000e+00> : vector<256xf32>
    %76 = vector.multi_reduction <add>, %75, %cst_25 [1] : vector<256x128xf32> to vector<256xf32>
    %77 = vector.shape_cast %76 : vector<256xf32> to vector<256x1xf32>
    %cst_26 = arith.constant 1.280000e+02 : f32
    %78 = vector.broadcast %cst_26 : f32 to vector<256x1xf32>
    %79 = arith.divf %77, %78 : vector<256x1xf32>
    %cst_27 = arith.constant 9.99999974E-6 : f32
    %80 = vector.broadcast %cst_27 : f32 to vector<256x1xf32>
    %81 = arith.addf %79, %80 : vector<256x1xf32>
    %82 = math.rsqrt %81 : vector<256x1xf32>
    %83 = vector.broadcast %82 : vector<256x1xf32> to vector<256x128xf32>
    %84 = arith.mulf %74, %83 : vector<256x128xf32>
    %85 = vector.broadcast %67 : vector<1x128xf32> to vector<256x128xf32>
    %86 = arith.mulf %84, %85 : vector<256x128xf32>
    %87 = vector.broadcast %68 : vector<1x128xf32> to vector<256x128xf32>
    %88 = arith.addf %86, %87 : vector<256x128xf32>
    %c0_28 = arith.constant 0 : index
    %c0_29 = arith.constant 0 : index
    %89 = vector.load %arg6[%c0_28, %c0_29] : memref<256x128xf32, #tpu.memory_space<vmem>>, vector<256x128xf32>
    tpu.vector_store %arg6[%c0_28, %c0_29], %88 {strides = array<i32>} : memref<256x128xf32, #tpu.memory_space<vmem>>, vector<256x128xf32>,
    return
  }
  func.func @transform_0(%arg0: i32) -> (i32, i32) {
    %c0_i32 = arith.constant 0 : i32
    %c0_i32_0 = arith.constant 0 : i32
    return %arg0, %c0_i32 : i32, i32
  }
  func.func @transform_1(%arg0: i32) -> (i32, i32) {
    %c0_i32 = arith.constant 0 : i32
    %c0_i32_0 = arith.constant 0 : i32
    %c0_i32_1 = arith.constant 0 : i32
    return %c0_i32, %c0_i32_0 : i32, i32
  }
  func.func @transform_2(%arg0: i32) -> (i32, i32) {
    %c0_i32 = arith.constant 0 : i32
    %c0_i32_0 = arith.constant 0 : i32
    %c0_i32_1 = arith.constant 0 : i32
    return %c0_i32, %c0_i32_0 : i32, i32
  }
  func.func @transform_3(%arg0: i32) -> (i32, i32) {
    %c0_i32 = arith.constant 0 : i32
    %c0_i32_0 = arith.constant 0 : i32
    %c0_i32_1 = arith.constant 0 : i32
    return %c0_i32, %c0_i32_0 : i32, i32
  }
  func.func @transform_4(%arg0: i32) -> (i32, i32) {
    %c0_i32 = arith.constant 0 : i32
    %c0_i32_0 = arith.constant 0 : i32
    %c0_i32_1 = arith.constant 0 : i32
    return %c0_i32, %c0_i32_0 : i32, i32
  }
  func.func @transform_5(%arg0: i32) -> (i32, i32) {
    %c0_i32 = arith.constant 0 : i32
    %c0_i32_0 = arith.constant 0 : i32
    return %arg0, %c0_i32 : i32, i32
  }
}

</mosaic_0001>

<llo_original>
// kernel: single_input_embedding_forward.1
$region0: #{single_input_embedding_forward.1}
  #allocation0 [shape = 'u32[]', space=smem, size = 0x4, offset = 0x4, fixed_abs, tag = 'smem constant byte address 0x4 - core index']
  #allocation1 [shape = 'u32[144,128]{1,0:T(1,128)}', space=vmem, size = 0x12000, scoped, tag = 'internal scratch']
  %s0 = inlined_call_operand.vmem [shape: bf16[512,4], index: 0, kind: input, shape index: {}]
  %s1 = inlined_call_operand.vmem [shape: bf16[4,32], index: 1, kind: input, shape index: {}]
  %s2 = inlined_call_operand.vmem [shape: bf16[32,64], index: 2, kind: input, shape index: {}]
  %s3 = inlined_call_operand.vmem [shape: bf16[64,128], index: 3, kind: input, shape index: {}]
  %s4 = inlined_call_operand.vmem [shape: f32[9,128], index: 4, kind: input, shape index: {}]
  %s5 = inlined_call_operand.hbm [shape: f32[512,128], index: 5, kind: output, shape index: {}]
  %s6 = sld [smem:[#allocation0]]
  $region53: #{single_input_embedding_forward.1} parent=0
    _
  %s8 = ssub.s32 1, %s6
  %s9 = scalar_select 0, %s8, %s6
  $region1: #{single_input_embedding_forward.1} parent=0
    #allocation2 [shape = 'u8[262144]{0}', space=vmem, size = 0x40000, scoped, tag = 'output window, operand 0']
    #allocation3 [shape = 's32[2]{0}', space=sflag, size = 0x8, scoped, tag = 'scoped memory for single_input_embedding_forward.1']
    %10 = vsyncpa [#allocation3], 0
    %s11 = scalar_lea.sflag [#allocation3], 1
    %12 = vsyncpa %s11, 0
    loop: start=0, step=1, limit=4
    $region2: #{single_input_embedding_forward.1} parent=1 // loop_pre_header
      _
    $region3: #{single_input_embedding_forward.1} parent=1 // loop_header
      %s14 = sphi 0, %s18
      %p15 = scmp.ge.s32.totalorder %s14, 4
      %s24 = sphi 0, %s26
      %s27 = sphi 0, %s24
      %s28 = sphi 0, %s27
      %s44 = sphi 0, %s28
      %s48 = sphi 0, %s48
      %s50 = sphi 0, %s48
      %s51 = sphi 0, %s50
      %s65 = sphi 0, %s51
      %s69 = sphi 0, %s69
      %s71 = sphi 0, %s69
      %s72 = sphi 0, %s71
      %s86 = sphi 0, %s72
      %s90 = sphi 0, %s90
      %s92 = sphi 0, %s90
      %s93 = sphi 0, %s92
      %s107 = sphi 0, %s93
      %s111 = sphi 0, %s111
      %s113 = sphi 0, %s111
      %s114 = sphi 0, %s113
      %s128 = sphi 0, %s114
      %s134 = sphi 0, %s136
      %s137 = sphi 0, %s134
      %s138 = sphi 0, %s137
      %s154 = sphi 0, %s138
    $region4: #{single_input_embedding_forward.1} parent=1 // loop_header_branch
      %17 = sbr.rel (%p15) target = $region8
    $region5: #{single_input_embedding_forward.1} parent=1 // loop_body
      %s19 = ssub.s32 %s14, 1
      %s20 = ssub.s32 %s14, 2
      %s21 = sadd.s32 %s14, 1
      %s22 = ssub.s32 %s14, %s21
      %p23 = scmp.eq.s32.totalorder %s22, 0
      %s25 = sadd.s32 %s24, 1
      %s26 = scalar_select %p23, %s24, %s25
      %p29 = pneg %p23
      %p30 = scmp.eq.s32.totalorder %s14, 1
      %p31 = por %p29, %p30
      %p32 = scmp.ne.s32.totalorder %s24, %s27
      %p33 = scmp.eq.s32.totalorder %s14, 0
      %p34 = por %p32, %p33
      %p35 = scmp.ne.s32.totalorder %s24, %s27
      %p36 = scmp.eq.s32.totalorder %s19, 1
      %p37 = por %p35, %p36
      %p38 = scmp.ne.s32.totalorder %s27, %s28
      %p39 = scmp.eq.s32.totalorder %s19, 0
      %p40 = por %p38, %p39
      %p41 = scmp.ne.s32.totalorder %s27, %s28
      %p42 = scmp.eq.s32.totalorder %s20, 1
      %p43 = por %p41, %p42
      %p45 = scmp.ne.s32.totalorder %s28, %s44
      %p46 = scmp.eq.s32.totalorder %s20, 0
      %p47 = por %p45, %p46
      %s49 = sadd.s32 %s48, 1
      %p52 = scmp.eq.s32.totalorder %s14, 1
      %p53 = scmp.ne.s32.totalorder %s48, %s50
      %p54 = scmp.eq.s32.totalorder %s14, 0
      %p55 = por %p53, %p54
      %p56 = scmp.ne.s32.totalorder %s48, %s50
      %p57 = scmp.eq.s32.totalorder %s19, 1
      %p58 = por %p56, %p57
      %p59 = scmp.ne.s32.totalorder %s50, %s51
      %p60 = scmp.eq.s32.totalorder %s19, 0
      %p61 = por %p59, %p60
      %p62 = scmp.ne.s32.totalorder %s50, %s51
      %p63 = scmp.eq.s32.totalorder %s20, 1
      %p64 = por %p62, %p63
      %p66 = scmp.ne.s32.totalorder %s51, %s65
      %p67 = scmp.eq.s32.totalorder %s20, 0
      %p68 = por %p66, %p67
      %s70 = sadd.s32 %s69, 1
      %p73 = scmp.eq.s32.totalorder %s14, 1
      %p74 = scmp.ne.s32.totalorder %s69, %s71
      %p75 = scmp.eq.s32.totalorder %s14, 0
      %p76 = por %p74, %p75
      %p77 = scmp.ne.s32.totalorder %s69, %s71
      %p78 = scmp.eq.s32.totalorder %s19, 1
      %p79 = por %p77, %p78
      %p80 = scmp.ne.s32.totalorder %s71, %s72
      %p81 = scmp.eq.s32.totalorder %s19, 0
      %p82 = por %p80, %p81
      %p83 = scmp.ne.s32.totalorder %s71, %s72
      %p84 = scmp.eq.s32.totalorder %s20, 1
      %p85 = por %p83, %p84
      %p87 = scmp.ne.s32.totalorder %s72, %s86
      %p88 = scmp.eq.s32.totalorder %s20, 0
      %p89 = por %p87, %p88
      %s91 = sadd.s32 %s90, 1
      %p94 = scmp.eq.s32.totalorder %s14, 1
      %p95 = scmp.ne.s32.totalorder %s90, %s92
      %p96 = scmp.eq.s32.totalorder %s14, 0
      %p97 = por %p95, %p96
      %p98 = scmp.ne.s32.totalorder %s90, %s92
      %p99 = scmp.eq.s32.totalorder %s19, 1
      %p100 = por %p98, %p99
      %p101 = scmp.ne.s32.totalorder %s92, %s93
      %p102 = scmp.eq.s32.totalorder %s19, 0
      %p103 = por %p101, %p102
      %p104 = scmp.ne.s32.totalorder %s92, %s93
      %p105 = scmp.eq.s32.totalorder %s20, 1
      %p106 = por %p104, %p105
      %p108 = scmp.ne.s32.totalorder %s93, %s107
      %p109 = scmp.eq.s32.totalorder %s20, 0
      %p110 = por %p108, %p109
      %s112 = sadd.s32 %s111, 1
      %p115 = scmp.eq.s32.totalorder %s14, 1
      %p116 = scmp.ne.s32.totalorder %s111, %s113
      %p117 = scmp.eq.s32.totalorder %s14, 0
      %p118 = por %p116, %p117
      %p119 = scmp.ne.s32.totalorder %s111, %s113
      %p120 = scmp.eq.s32.totalorder %s19, 1
      %p121 = por %p119, %p120
      %p122 = scmp.ne.s32.totalorder %s113, %s114
      %p123 = scmp.eq.s32.totalorder %s19, 0
      %p124 = por %p122, %p123
      %p125 = scmp.ne.s32.totalorder %s113, %s114
      %p126 = scmp.eq.s32.totalorder %s20, 1
      %p127 = por %p125, %p126
      %p129 = scmp.ne.s32.totalorder %s114, %s128
      %p130 = scmp.eq.s32.totalorder %s20, 0
      %p131 = por %p129, %p130
      %s132 = ssub.s32 %s14, %s21
      %p133 = scmp.eq.s32.totalorder %s132, 0
      %s135 = sadd.s32 %s134, 1
      %s136 = scalar_select %p133, %s134, %s135
      %p139 = pneg %p133
      %p140 = scmp.eq.s32.totalorder %s14, 1
      %p141 = por %p139, %p140
      %p142 = scmp.ne.s32.totalorder %s134, %s137
      %p143 = scmp.eq.s32.totalorder %s14, 0
      %p144 = por %p142, %p143
      %p145 = scmp.ne.s32.totalorder %s134, %s137
      %p146 = scmp.eq.s32.totalorder %s19, 1
      %p147 = por %p145, %p146
      %p148 = scmp.ne.s32.totalorder %s137, %s138
      %p149 = scmp.eq.s32.totalorder %s19, 0
      %p150 = por %p148, %p149
      %p151 = scmp.ne.s32.totalorder %s137, %s138
      %p152 = scmp.eq.s32.totalorder %s20, 1
      %p153 = por %p151, %p152
      %p155 = scmp.ne.s32.totalorder %s138, %s154
      %p156 = scmp.eq.s32.totalorder %s20, 0
      %p157 = por %p155, %p156
      %p158 = scmp.le.s32.totalorder 1, %s14
      %p159 = scmp.lt.s32.totalorder %s14, 3
      %p160 = pnand %p158, %p159
      %p161 = pneg %p160
      // Predicated region
      $region9: #{single_input_embedding_forward.1} parent=5 // pred_check
        _
      $region10: #{single_input_embedding_forward.1} parent=5 // pred_check_branch
        %163 = sbr.rel (%p160) target = $region12
      $region11: #{single_input_embedding_forward.1} parent=5 // pred_region
        %s164 = ssub.s32 %s14, 1
        // Predicated region
        $region13: #{single_input_embedding_forward.1} parent=11 // pred_check
          %p165 = pneg %p61
        $region14: #{single_input_embedding_forward.1} parent=11 // pred_check_branch
          %167 = sbr.rel (%p165) target = $region16
        $region15: #{single_input_embedding_forward.1} parent=11 // pred_region
          _
        $region16: #{single_input_embedding_forward.1} parent=11 // pred_fallthru
          _
        // Predicated region
        $region17: #{single_input_embedding_forward.1} parent=11 // pred_check
          %p168 = pneg %p82
        $region18: #{single_input_embedding_forward.1} parent=11 // pred_check_branch
          %170 = sbr.rel (%p168) target = $region20
        $region19: #{single_input_embedding_forward.1} parent=11 // pred_region
          _
        $region20: #{single_input_embedding_forward.1} parent=11 // pred_fallthru
          _
        // Predicated region
        $region21: #{single_input_embedding_forward.1} parent=11 // pred_check
          %p171 = pneg %p103
        $region22: #{single_input_embedding_forward.1} parent=11 // pred_check_branch
          %173 = sbr.rel (%p171) target = $region24
        $region23: #{single_input_embedding_forward.1} parent=11 // pred_region
          _
        $region24: #{single_input_embedding_forward.1} parent=11 // pred_fallthru
          _
        // Predicated region
        $region25: #{single_input_embedding_forward.1} parent=11 // pred_check
          %p174 = pneg %p124
        $region26: #{single_input_embedding_forward.1} parent=11 // pred_check_branch
          %176 = sbr.rel (%p174) target = $region28
        $region27: #{single_input_embedding_forward.1} parent=11 // pred_region
          _
        $region28: #{single_input_embedding_forward.1} parent=11 // pred_fallthru
          _
      $region12: #{single_input_embedding_forward.1} parent=5 // pred_fallthru
        _
      %p177 = scmp.lt.s32.totalorder %s14, 2
      // Predicated region
      $region29: #{single_input_embedding_forward.1} parent=5 // pred_check
        %p178 = pneg %p177
      $region30: #{single_input_embedding_forward.1} parent=5 // pred_check_branch
        %180 = sbr.rel (%p178) target = $region32
      $region31: #{single_input_embedding_forward.1} parent=5 // pred_region
        // Predicated region
        $region33: #{single_input_embedding_forward.1} parent=31 // pred_check
          %p181 = pneg %p34
        $region34: #{single_input_embedding_forward.1} parent=31 // pred_check_branch
          %183 = sbr.rel (%p181) target = $region36
        $region35: #{single_input_embedding_forward.1} parent=31 // pred_region
          %s184 = smul.u32 32, %s14
          %p185 = scmp.lt.s32.totalorder %s184, 63
          %s186 = scalar_select %p185, %s184, 63
          %s187 = smul.addr %s186, 4
          %s188 = scalar_lea.vmem %s0, %s187
          %s189 = smul.u32 32, %s14
        $region36: #{single_input_embedding_forward.1} parent=31 // pred_fallthru
          _
      $region32: #{single_input_embedding_forward.1} parent=5 // pred_fallthru
        _
      %p190 = scmp.le.s32.totalorder 1, %s14
      %p191 = scmp.lt.s32.totalorder %s14, 3
      %p192 = pnand %p190, %p191
      %p193 = pneg %p192
      // Predicated region
      $region37: #{single_input_embedding_forward.1} parent=5 // pred_check
        _
      $region38: #{single_input_embedding_forward.1} parent=5 // pred_check_branch
        %195 = sbr.rel (%p192) target = $region40
      $region39: #{single_input_embedding_forward.1} parent=5 // pred_region
        %s196 = ssub.s32 %s14, 1
        %s197 = smul.u32 32, %s19
        %p198 = scmp.lt.s32.totalorder %s197, 63
        %s199 = scalar_select %p198, %s197, 63
        %s200 = smul.addr %s199, 4
        %s201 = scalar_lea.vmem %s0, %s200
        %p202 = pneg %p40
        %p203 = pneg %p37
        %p204 = pneg %p61
        %p205 = pneg %p58
        %p206 = pneg %p82
        %p207 = pneg %p79
        %p208 = pneg %p103
        %p209 = pneg %p100
        %p210 = pneg %p124
        %p211 = pneg %p121
        %p212 = pneg %p150
        %p213 = pneg %p147
        %s214 = sand.u32 %s137, 1
        %s215 = scalar_lea.sflag [#allocation3], %s214
        %s216 = sand.u32 %s137, 1
        %s217 = smul.addr %s216, 256
        %s218 = scalar_lea.vmem [#allocation2], %s217
        %s219 = smul.u32 32, %s19
        %p220 = scmp.lt.s32.totalorder %s219, 63
        %s221 = scalar_select %p220, %s219, 63
        %s222 = smul.addr %s221, 4
        %s223 = scalar_lea.vmem %s0, %s222
        %s224 = smul.u32 32, %s19
        %s225 = smul.u32 32, %s19
        %v227 = vld [vmem:[%s223] sm:$0xf]
        %v228 = vld [vmem:[%s223 + $0x4] sm:$0xf]
        %v229 = vld [vmem:[%s223 + $0x8] sm:$0xf]
        %v230 = vld [vmem:[%s223 + $0xc] sm:$0xf]
        %v231 = vld [vmem:[%s223 + $0x10] sm:$0xf]
        %v232 = vld [vmem:[%s223 + $0x14] sm:$0xf]
        %v233 = vld [vmem:[%s223 + $0x18] sm:$0xf]
        %v234 = vld [vmem:[%s223 + $0x1c] sm:$0xf]
        %v235 = vld [vmem:[%s223 + $0x20] sm:$0xf]
        %v236 = vld [vmem:[%s223 + $0x24] sm:$0xf]
        %v237 = vld [vmem:[%s223 + $0x28] sm:$0xf]
        %v238 = vld [vmem:[%s223 + $0x2c] sm:$0xf]
        %v239 = vld [vmem:[%s223 + $0x30] sm:$0xf]
        %v240 = vld [vmem:[%s223 + $0x34] sm:$0xf]
        %v241 = vld [vmem:[%s223 + $0x38] sm:$0xf]
        %v242 = vld [vmem:[%s223 + $0x3c] sm:$0xf]
        %v243 = vld [vmem:[%s223 + $0x40] sm:$0xf]
        %v244 = vld [vmem:[%s223 + $0x44] sm:$0xf]
        %v245 = vld [vmem:[%s223 + $0x48] sm:$0xf]
        %v246 = vld [vmem:[%s223 + $0x4c] sm:$0xf]
        %v247 = vld [vmem:[%s223 + $0x50] sm:$0xf]
        %v248 = vld [vmem:[%s223 + $0x54] sm:$0xf]
        %v249 = vld [vmem:[%s223 + $0x58] sm:$0xf]
        %v250 = vld [vmem:[%s223 + $0x5c] sm:$0xf]
        %v251 = vld [vmem:[%s223 + $0x60] sm:$0xf]
        %v252 = vld [vmem:[%s223 + $0x64] sm:$0xf]
        %v253 = vld [vmem:[%s223 + $0x68] sm:$0xf]
        %v254 = vld [vmem:[%s223 + $0x6c] sm:$0xf]
        %v255 = vld [vmem:[%s223 + $0x70] sm:$0xf]
        %v256 = vld [vmem:[%s223 + $0x74] sm:$0xf]
        %v257 = vld [vmem:[%s223 + $0x78] sm:$0xf]
        %v258 = vld [vmem:[%s223 + $0x7c] sm:$0xf]
        %v259 = vld [vmem:[%s4] sm:$0xff]
        %v260 = vld [vmem:[%s4 + $0x8] sm:$0x1]
        %v261 = vld [vmem:[%s1] sm:$0x3]
        %v262 = vlaneseq
        %v263 = vshrl.u32 %v262, 7
        %v264 = vsub.s32 0, %v263
        %v265 = vrot.slane %v259, %v264
        %v298 = vunpack.c.l.b16 %v227
        %v299 = vunpack.c.l.b16 %v228
        %v300 = vunpack.c.l.b16 %v229
        %v301 = vunpack.c.l.b16 %v230
        %v302 = vunpack.c.l.b16 %v231
        %v303 = vunpack.c.l.b16 %v232
        %v304 = vunpack.c.l.b16 %v233
        %v305 = vunpack.c.l.b16 %v234
        %v306 = vunpack.c.l.b16 %v235
        %v307 = vunpack.c.l.b16 %v236
        %v308 = vunpack.c.l.b16 %v237
        %v309 = vunpack.c.l.b16 %v238
        %v310 = vunpack.c.l.b16 %v239
        %v311 = vunpack.c.l.b16 %v240
        %v312 = vunpack.c.l.b16 %v241
        %v313 = vunpack.c.l.b16 %v242
        %v314 = vunpack.c.l.b16 %v243
        %v315 = vunpack.c.l.b16 %v244
        %v316 = vunpack.c.l.b16 %v245
        %v317 = vunpack.c.l.b16 %v246
        %v318 = vunpack.c.l.b16 %v247
        %v319 = vunpack.c.l.b16 %v248
        %v320 = vunpack.c.l.b16 %v249
        %v321 = vunpack.c.l.b16 %v250
        %v322 = vunpack.c.l.b16 %v251
        %v323 = vunpack.c.l.b16 %v252
        %v324 = vunpack.c.l.b16 %v253
        %v325 = vunpack.c.l.b16 %v254
        %v326 = vunpack.c.l.b16 %v255
        %v327 = vunpack.c.l.b16 %v256
        %v328 = vunpack.c.l.b16 %v257
        %v329 = vunpack.c.l.b16 %v258
        %v330 = vpack.c.b16 %v299, %v298
        %v331 = vpack.c.b16 %v301, %v300
        %v332 = vpack.c.b16 %v303, %v302
        %v333 = vpack.c.b16 %v305, %v304
        %v334 = vpack.c.b16 %v307, %v306
        %v335 = vpack.c.b16 %v309, %v308
        %v336 = vpack.c.b16 %v311, %v310
        %v337 = vpack.c.b16 %v313, %v312
        %v338 = vpack.c.b16 %v315, %v314
        %v339 = vpack.c.b16 %v317, %v316
        %v340 = vpack.c.b16 %v319, %v318
        %v341 = vpack.c.b16 %v321, %v320
        %v342 = vpack.c.b16 %v323, %v322
        %v343 = vpack.c.b16 %v325, %v324
        %v344 = vpack.c.b16 %v327, %v326
        %v345 = vpack.c.b16 %v329, %v328
        %vm346 = vcmask 31744
        %v348 = vsel %vm346, %v330, 0
        %v351 = vsel %vm346, %v331, 0
        %v354 = vsel %vm346, %v332, 0
        %v357 = vsel %vm346, %v333, 0
        %v360 = vsel %vm346, %v334, 0
        %v363 = vsel %vm346, %v335, 0
        %v366 = vsel %vm346, %v336, 0
        %v369 = vsel %vm346, %v337, 0
        %v372 = vsel %vm346, %v338, 0
        %v375 = vsel %vm346, %v339, 0
        %v378 = vsel %vm346, %v340, 0
        %v381 = vsel %vm346, %v341, 0
        %v384 = vsel %vm346, %v342, 0
        %v387 = vsel %vm346, %v343, 0
        %v390 = vsel %vm346, %v344, 0
        %v393 = vsel %vm346, %v345, 0
        %vm395 = vcmask 1041408
        %v397 = vsel %vm395, %v261, 0
        %399 = vmatprep.subr.bf16.mxu0 0
        %400 = vmatpush1.bf16.msra.mxu0 %v397
        %401 = vmatprep.subr.bf16.mxu0 0
        %402 = vmatpush1.bf16.msra.mxu0 0
        %403 = vmatprep.subr.bf16.mxu0 0
        %404 = vmatpush1.bf16.msra.mxu0 0
        %405 = vmatprep.subr.bf16.mxu0 0
        %406 = vmatpush1.bf16.msra.mxu0 0
        %407 = vmatprep.subr.bf16.mxu0 0
        %408 = vmatpush1.bf16.msra.mxu0 0
        %409 = vmatprep.subr.bf16.mxu0 0
        %410 = vmatpush1.bf16.msra.mxu0 0
        %411 = vmatprep.subr.bf16.mxu0 0
        %412 = vmatpush1.bf16.msra.mxu0 0
        %413 = vmatprep.subr.bf16.mxu0 0
        %414 = vmatpush1.bf16.msra.mxu0 0
        %415 = vmatprep.subr.bf16.mxu0 0
        %416 = vmatpush1.bf16.msra.mxu0 0
        %417 = vmatprep.subr.bf16.mxu0 0
        %418 = vmatpush1.bf16.msra.mxu0 0
        %419 = vmatprep.subr.bf16.mxu0 0
        %420 = vmatpush1.bf16.msra.mxu0 0
        %421 = vmatprep.subr.bf16.mxu0 0
        %422 = vmatpush1.bf16.msra.mxu0 0
        %423 = vmatprep.subr.bf16.mxu0 0
        %424 = vmatpush1.bf16.msra.mxu0 0
        %425 = vmatprep.subr.bf16.mxu0 0
        %426 = vmatpush1.bf16.msra.mxu0 0
        %427 = vmatprep.subr.bf16.mxu0 0
        %428 = vmatpush1.bf16.msra.mxu0 0
        %429 = vmatprep.subr.bf16.mxu0 0
        %430 = vmatpush1.bf16.msra.mxu0 0
        %431 = vmatprep.mubr.bf16.mxu0 0
        %432 = vmatmul.mubr.bf16.gmra.mrb[0].mxu0 %v348
        %v433 = vpop.f32.mrb[0].mxu0
        %v434 = vadd.f32 %v265, %v433
        %v435 = vpop.f32.mrb[0].mxu0
        %v436 = vpop.f32.mrb[0].mxu0
        %v437 = vadd.f32 %v265, %v436
        %v438 = vpop.f32.mrb[0].mxu0
        %439 = vmatprep.mubr.bf16.mxu0 0
        %440 = vmatmul.mubr.bf16.gmra.mrb[0].mxu0 %v351
        %v441 = vpop.f32.mrb[0].mxu0
        %v442 = vadd.f32 %v265, %v441
        %v443 = vpop.f32.mrb[0].mxu0
        %v444 = vpop.f32.mrb[0].mxu0
        %v445 = vadd.f32 %v265, %v444
        %v446 = vpop.f32.mrb[0].mxu0
        %447 = vmatprep.mubr.bf16.mxu0 0
        %448 = vmatmul.mubr.bf16.gmra.mrb[0].mxu0 %v354
        %v449 = vpop.f32.mrb[0].mxu0
        %v450 = vadd.f32 %v265, %v449
        %v451 = vpop.f32.mrb[0].mxu0
        %v452 = vpop.f32.mrb[0].mxu0
        %v453 = vadd.f32 %v265, %v452
        %v454 = vpop.f32.mrb[0].mxu0
        %455 = vmatprep.mubr.bf16.mxu0 0
        %456 = vmatmul.mubr.bf16.gmra.mrb[0].mxu0 %v357
        %v457 = vpop.f32.mrb[0].mxu0
        %v458 = vadd.f32 %v265, %v457
        %v459 = vpop.f32.mrb[0].mxu0
        %v460 = vpop.f32.mrb[0].mxu0
        %v461 = vadd.f32 %v265, %v460
        %v462 = vpop.f32.mrb[0].mxu0
        %463 = vmatprep.mubr.bf16.mxu0 0
        %464 = vmatmul.mubr.bf16.gmra.mrb[0].mxu0 %v360
        %v465 = vpop.f32.mrb[0].mxu0
        %v466 = vadd.f32 %v265, %v465
        %v467 = vpop.f32.mrb[0].mxu0
        %v468 = vpop.f32.mrb[0].mxu0
        %v469 = vadd.f32 %v265, %v468
        %v470 = vpop.f32.mrb[0].mxu0
        %471 = vmatprep.mubr.bf16.mxu0 0
        %472 = vmatmul.mubr.bf16.gmra.mrb[0].mxu0 %v363
        %v473 = vpop.f32.mrb[0].mxu0
        %v474 = vadd.f32 %v265, %v473
        %v475 = vpop.f32.mrb[0].mxu0
        %v476 = vpop.f32.mrb[0].mxu0
        %v477 = vadd.f32 %v265, %v476
        %v478 = vpop.f32.mrb[0].mxu0
        %479 = vmatprep.mubr.bf16.mxu0 0
        %480 = vmatmul.mubr.bf16.gmra.mrb[0].mxu0 %v366
        %v481 = vpop.f32.mrb[0].mxu0
        %v482 = vadd.f32 %v265, %v481
        %v483 = vpop.f32.mrb[0].mxu0
        %v484 = vpop.f32.mrb[0].mxu0
        %v485 = vadd.f32 %v265, %v484
        %v486 = vpop.f32.mrb[0].mxu0
        %487 = vmatprep.mubr.bf16.mxu0 0
        %488 = vmatmul.mubr.bf16.gmra.mrb[0].mxu0 %v369
        %v489 = vpop.f32.mrb[0].mxu0
        %v490 = vadd.f32 %v265, %v489
        %v491 = vpop.f32.mrb[0].mxu0
        %v492 = vpop.f32.mrb[0].mxu0
        %v493 = vadd.f32 %v265, %v492
        %v494 = vpop.f32.mrb[0].mxu0
        %495 = vmatprep.mubr.bf16.mxu0 0
        %496 = vmatmul.mubr.bf16.gmra.mrb[0].mxu0 %v372
        %v497 = vpop.f32.mrb[0].mxu0
        %v498 = vadd.f32 %v265, %v497
        %v499 = vpop.f32.mrb[0].mxu0
        %v500 = vpop.f32.mrb[0].mxu0
        %v501 = vadd.f32 %v265, %v500
        %v502 = vpop.f32.mrb[0].mxu0
        %503 = vmatprep.mubr.bf16.mxu0 0
        %504 = vmatmul.mubr.bf16.gmra.mrb[0].mxu0 %v375
        %v505 = vpop.f32.mrb[0].mxu0
        %v506 = vadd.f32 %v265, %v505
        %v507 = vpop.f32.mrb[0].mxu0
        %v508 = vpop.f32.mrb[0].mxu0
        %v509 = vadd.f32 %v265, %v508
        %v510 = vpop.f32.mrb[0].mxu0
        %511 = vmatprep.mubr.bf16.mxu0 0
        %512 = vmatmul.mubr.bf16.gmra.mrb[0].mxu0 %v378
        %v513 = vpop.f32.mrb[0].mxu0
        %v514 = vadd.f32 %v265, %v513
        %v515 = vpop.f32.mrb[0].mxu0
        %v516 = vpop.f32.mrb[0].mxu0
        %v517 = vadd.f32 %v265, %v516
        %v518 = vpop.f32.mrb[0].mxu0
        %519 = vmatprep.mubr.bf16.mxu0 0
        %520 = vmatmul.mubr.bf16.gmra.mrb[0].mxu0 %v381
        %v521 = vpop.f32.mrb[0].mxu0
        %v522 = vadd.f32 %v265, %v521
        %v523 = vpop.f32.mrb[0].mxu0
        %v524 = vpop.f32.mrb[0].mxu0
        %v525 = vadd.f32 %v265, %v524
        %v526 = vpop.f32.mrb[0].mxu0
        %527 = vmatprep.mubr.bf16.mxu0 0
        %528 = vmatmul.mubr.bf16.gmra.mrb[0].mxu0 %v384
        %v529 = vpop.f32.mrb[0].mxu0
        %v530 = vadd.f32 %v265, %v529
        %v531 = vpop.f32.mrb[0].mxu0
        %v532 = vpop.f32.mrb[0].mxu0
        %v533 = vadd.f32 %v265, %v532
        %v534 = vpop.f32.mrb[0].mxu0
        %535 = vmatprep.mubr.bf16.mxu0 0
        %536 = vmatmul.mubr.bf16.gmra.mrb[0].mxu0 %v387
        %v537 = vpop.f32.mrb[0].mxu0
        %v538 = vadd.f32 %v265, %v537
        %v539 = vpop.f32.mrb[0].mxu0
        %v540 = vpop.f32.mrb[0].mxu0
        %v541 = vadd.f32 %v265, %v540
        %v542 = vpop.f32.mrb[0].mxu0
        %543 = vmatprep.mubr.bf16.mxu0 0
        %544 = vmatmul.mubr.bf16.gmra.mrb[0].mxu0 %v390
        %v545 = vpop.f32.mrb[0].mxu0
        %v546 = vadd.f32 %v265, %v545
        %v547 = vpop.f32.mrb[0].mxu0
        %v548 = vpop.f32.mrb[0].mxu0
        %v549 = vadd.f32 %v265, %v548
        %v550 = vpop.f32.mrb[0].mxu0
        %551 = vmatprep.mubr.bf16.mxu0 0
        %552 = vmatmul.mubr.bf16.gmra.mrb[0].mxu0 %v393
        %v553 = vpop.f32.mrb[0].mxu0
        %v554 = vadd.f32 %v265, %v553
        %v555 = vpop.f32.mrb[0].mxu0
        %v556 = vpop.f32.mrb[0].mxu0
        %v557 = vadd.f32 %v265, %v556
        %v558 = vpop.f32.mrb[0].mxu0
        %559 = vdwg.mxu0
        %vm560 = vcmask 261120
        %v561 = vsel %vm560, %v434, 0.0
        %562 = vadd.xlane.f32.xlu0 %v561
        %v563 = vpop.xlane.xlu0 %562
        %v564 = vsel %vm560, %v437, 0.0
        %565 = vadd.xlane.f32.xlu0 %v564
        %v566 = vpop.xlane.xlu0 %565
        %v567 = vsel %vm560, %v442, 0.0
        %568 = vadd.xlane.f32.xlu0 %v567
        %v569 = vpop.xlane.xlu0 %568
        %v570 = vsel %vm560, %v445, 0.0
        %571 = vadd.xlane.f32.xlu0 %v570
        %v572 = vpop.xlane.xlu0 %571
        %v573 = vsel %vm560, %v450, 0.0
        %574 = vadd.xlane.f32.xlu0 %v573
        %v575 = vpop.xlane.xlu0 %574
        %v576 = vsel %vm560, %v453, 0.0
        %577 = vadd.xlane.f32.xlu0 %v576
        %v578 = vpop.xlane.xlu0 %577
        %v579 = vsel %vm560, %v458, 0.0
        %580 = vadd.xlane.f32.xlu0 %v579
        %v581 = vpop.xlane.xlu0 %580
        %v582 = vsel %vm560, %v461, 0.0
        %583 = vadd.xlane.f32.xlu0 %v582
        %v584 = vpop.xlane.xlu0 %583
        %v585 = vsel %vm560, %v466, 0.0
        %586 = vadd.xlane.f32.xlu0 %v585
        %v587 = vpop.xlane.xlu0 %586
        %v588 = vsel %vm560, %v469, 0.0
        %589 = vadd.xlane.f32.xlu0 %v588
        %v590 = vpop.xlane.xlu0 %589
        %v591 = vsel %vm560, %v474, 0.0
        %592 = vadd.xlane.f32.xlu0 %v591
        %v593 = vpop.xlane.xlu0 %592
        %v594 = vsel %vm560, %v477, 0.0
        %595 = vadd.xlane.f32.xlu0 %v594
        %v596 = vpop.xlane.xlu0 %595
        %v597 = vsel %vm560, %v482, 0.0
        %598 = vadd.xlane.f32.xlu0 %v597
        %v599 = vpop.xlane.xlu0 %598
        %v600 = vsel %vm560, %v485, 0.0
        %601 = vadd.xlane.f32.xlu0 %v600
        %v602 = vpop.xlane.xlu0 %601
        %v603 = vsel %vm560, %v490, 0.0
        %604 = vadd.xlane.f32.xlu0 %v603
        %v605 = vpop.xlane.xlu0 %604
        %v606 = vsel %vm560, %v493, 0.0
        %607 = vadd.xlane.f32.xlu0 %v606
        %v608 = vpop.xlane.xlu0 %607
        %v609 = vsel %vm560, %v498, 0.0
        %610 = vadd.xlane.f32.xlu0 %v609
        %v611 = vpop.xlane.xlu0 %610
        %v612 = vsel %vm560, %v501, 0.0
        %613 = vadd.xlane.f32.xlu0 %v612
        %v614 = vpop.xlane.xlu0 %613
        %v615 = vsel %vm560, %v506, 0.0
        %616 = vadd.xlane.f32.xlu0 %v615
        %v617 = vpop.xlane.xlu0 %616
        %v618 = vsel %vm560, %v509, 0.0
        %619 = vadd.xlane.f32.xlu0 %v618
        %v620 = vpop.xlane.xlu0 %619
        %v621 = vsel %vm560, %v514, 0.0
        %622 = vadd.xlane.f32.xlu0 %v621
        %v623 = vpop.xlane.xlu0 %622
        %v624 = vsel %vm560, %v517, 0.0
        %625 = vadd.xlane.f32.xlu0 %v624
        %v626 = vpop.xlane.xlu0 %625
        %v627 = vsel %vm560, %v522, 0.0
        %628 = vadd.xlane.f32.xlu0 %v627
        %v629 = vpop.xlane.xlu0 %628
        %v630 = vsel %vm560, %v525, 0.0
        %631 = vadd.xlane.f32.xlu0 %v630
        %v632 = vpop.xlane.xlu0 %631
        %v633 = vsel %vm560, %v530, 0.0
        %634 = vadd.xlane.f32.xlu0 %v633
        %v635 = vpop.xlane.xlu0 %634
        %v636 = vsel %vm560, %v533, 0.0
        %637 = vadd.xlane.f32.xlu0 %v636
        %v638 = vpop.xlane.xlu0 %637
        %v639 = vsel %vm560, %v538, 0.0
        %640 = vadd.xlane.f32.xlu0 %v639
        %v641 = vpop.xlane.xlu0 %640
        %v642 = vsel %vm560, %v541, 0.0
        %643 = vadd.xlane.f32.xlu0 %v642
        %v644 = vpop.xlane.xlu0 %643
        %v645 = vsel %vm560, %v546, 0.0
        %646 = vadd.xlane.f32.xlu0 %v645
        %v647 = vpop.xlane.xlu0 %646
        %v648 = vsel %vm560, %v549, 0.0
        %649 = vadd.xlane.f32.xlu0 %v648
        %v650 = vpop.xlane.xlu0 %649
        %v651 = vsel %vm560, %v554, 0.0
        %652 = vadd.xlane.f32.xlu0 %v651
        %v653 = vpop.xlane.xlu0 %652
        %v654 = vsel %vm560, %v557, 0.0
        %655 = vadd.xlane.f32.xlu0 %v654
        %v656 = vpop.xlane.xlu0 %655
        %v657 = vrcp.pop 32.0
        %v658 = vmul.f32 %v563, %v657
        %v659 = vmul.f32 %v566, %v657
        %v660 = vmul.f32 %v569, %v657
        %v661 = vmul.f32 %v572, %v657
        %v662 = vmul.f32 %v575, %v657
        %v663 = vmul.f32 %v578, %v657
        %v664 = vmul.f32 %v581, %v657
        %v665 = vmul.f32 %v584, %v657
        %v666 = vmul.f32 %v587, %v657
        %v667 = vmul.f32 %v590, %v657
        %v668 = vmul.f32 %v593, %v657
        %v669 = vmul.f32 %v596, %v657
        %v670 = vmul.f32 %v599, %v657
        %v671 = vmul.f32 %v602, %v657
        %v672 = vmul.f32 %v605, %v657
        %v673 = vmul.f32 %v608, %v657
        %v674 = vmul.f32 %v611, %v657
        %v675 = vmul.f32 %v614, %v657
        %v676 = vmul.f32 %v617, %v657
        %v677 = vmul.f32 %v620, %v657
        %v678 = vmul.f32 %v623, %v657
        %v679 = vmul.f32 %v626, %v657
        %v680 = vmul.f32 %v629, %v657
        %v681 = vmul.f32 %v632, %v657
        %v682 = vmul.f32 %v635, %v657
        %v683 = vmul.f32 %v638, %v657
        %v684 = vmul.f32 %v641, %v657
        %v685 = vmul.f32 %v644, %v657
        %v686 = vmul.f32 %v647, %v657
        %v687 = vmul.f32 %v650, %v657
        %v688 = vmul.f32 %v653, %v657
        %v689 = vmul.f32 %v656, %v657
        %v690 = vsub.f32 %v434, %v658
        %v691 = vsub.f32 %v437, %v659
        %v692 = vsub.f32 %v442, %v660
        %v693 = vsub.f32 %v445, %v661
        %v694 = vsub.f32 %v450, %v662
        %v695 = vsub.f32 %v453, %v663
        %v696 = vsub.f32 %v458, %v664
        %v697 = vsub.f32 %v461, %v665
        %v698 = vsub.f32 %v466, %v666
        %v699 = vsub.f32 %v469, %v667
        %v700 = vsub.f32 %v474, %v668
        %v701 = vsub.f32 %v477, %v669
        %v702 = vsub.f32 %v482, %v670
        %v703 = vsub.f32 %v485, %v671
        %v704 = vsub.f32 %v490, %v672
        %v705 = vsub.f32 %v493, %v673
        %v706 = vsub.f32 %v498, %v674
        %v707 = vsub.f32 %v501, %v675
        %v708 = vsub.f32 %v506, %v676
        %v709 = vsub.f32 %v509, %v677
        %v710 = vsub.f32 %v514, %v678
        %v711 = vsub.f32 %v517, %v679
        %v712 = vsub.f32 %v522, %v680
        %v713 = vsub.f32 %v525, %v681
        %v714 = vsub.f32 %v530, %v682
        %v715 = vsub.f32 %v533, %v683
        %v716 = vsub.f32 %v538, %v684
        %v717 = vsub.f32 %v541, %v685
        %v718 = vsub.f32 %v546, %v686
        %v719 = vsub.f32 %v549, %v687
        %v720 = vsub.f32 %v554, %v688
        %v721 = vsub.f32 %v557, %v689
        %v722 = vmul.f32 %v690, %v690
        %v723 = vmul.f32 %v691, %v691
        %v724 = vmul.f32 %v692, %v692
        %v725 = vmul.f32 %v693, %v693
        %v726 = vmul.f32 %v694, %v694
        %v727 = vmul.f32 %v695, %v695
        %v728 = vmul.f32 %v696, %v696
        %v729 = vmul.f32 %v697, %v697
        %v730 = vmul.f32 %v698, %v698
        %v731 = vmul.f32 %v699, %v699
        %v732 = vmul.f32 %v700, %v700
        %v733 = vmul.f32 %v701, %v701
        %v734 = vmul.f32 %v702, %v702
        %v735 = vmul.f32 %v703, %v703
        %v736 = vmul.f32 %v704, %v704
        %v737 = vmul.f32 %v705, %v705
        %v738 = vmul.f32 %v706, %v706
        %v739 = vmul.f32 %v707, %v707
        %v740 = vmul.f32 %v708, %v708
        %v741 = vmul.f32 %v709, %v709
        %v742 = vmul.f32 %v710, %v710
        %v743 = vmul.f32 %v711, %v711
        %v744 = vmul.f32 %v712, %v712
        %v745 = vmul.f32 %v713, %v713
        %v746 = vmul.f32 %v714, %v714
        %v747 = vmul.f32 %v715, %v715
        %v748 = vmul.f32 %v716, %v716
        %v749 = vmul.f32 %v717, %v717
        %v750 = vmul.f32 %v718, %v718
        %v751 = vmul.f32 %v719, %v719
        %v752 = vmul.f32 %v720, %v720
        %v753 = vmul.f32 %v721, %v721
        %v754 = vsel %vm560, %v722, 0.0
        %755 = vadd.xlane.f32.xlu0 %v754
        %v756 = vpop.xlane.xlu0 %755
        %v757 = vsel %vm560, %v723, 0.0
        %758 = vadd.xlane.f32.xlu0 %v757
        %v759 = vpop.xlane.xlu0 %758
        %v760 = vsel %vm560, %v724, 0.0
        %761 = vadd.xlane.f32.xlu0 %v760
        %v762 = vpop.xlane.xlu0 %761
        %v763 = vsel %vm560, %v725, 0.0
        %764 = vadd.xlane.f32.xlu0 %v763
        %v765 = vpop.xlane.xlu0 %764
        %v766 = vsel %vm560, %v726, 0.0
        %767 = vadd.xlane.f32.xlu0 %v766
        %v768 = vpop.xlane.xlu0 %767
        %v769 = vsel %vm560, %v727, 0.0
        %770 = vadd.xlane.f32.xlu0 %v769
        %v771 = vpop.xlane.xlu0 %770
        %v772 = vsel %vm560, %v728, 0.0
        %773 = vadd.xlane.f32.xlu0 %v772
        %v774 = vpop.xlane.xlu0 %773
        %v775 = vsel %vm560, %v729, 0.0
        %776 = vadd.xlane.f32.xlu0 %v775
        %v777 = vpop.xlane.xlu0 %776
        %v778 = vsel %vm560, %v730, 0.0
        %779 = vadd.xlane.f32.xlu0 %v778
        %v780 = vpop.xlane.xlu0 %779
        %v781 = vsel %vm560, %v731, 0.0
        %782 = vadd.xlane.f32.xlu0 %v781
        %v783 = vpop.xlane.xlu0 %782
        %v784 = vsel %vm560, %v732, 0.0
        %785 = vadd.xlane.f32.xlu0 %v784
        %v786 = vpop.xlane.xlu0 %785
        %v787 = vsel %vm560, %v733, 0.0
        %788 = vadd.xlane.f32.xlu0 %v787
        %v789 = vpop.xlane.xlu0 %788
        %v790 = vsel %vm560, %v734, 0.0
        %791 = vadd.xlane.f32.xlu0 %v790
        %v792 = vpop.xlane.xlu0 %791
        %v793 = vsel %vm560, %v735, 0.0
        %794 = vadd.xlane.f32.xlu0 %v793
        %v795 = vpop.xlane.xlu0 %794
        %v796 = vsel %vm560, %v736, 0.0
        %797 = vadd.xlane.f32.xlu0 %v796
        %v798 = vpop.xlane.xlu0 %797
        %v799 = vsel %vm560, %v737, 0.0
        %800 = vadd.xlane.f32.xlu0 %v799
        %v801 = vpop.xlane.xlu0 %800
        %v802 = vsel %vm560, %v738, 0.0
        %803 = vadd.xlane.f32.xlu0 %v802
        %v804 = vpop.xlane.xlu0 %803
        %v805 = vsel %vm560, %v739, 0.0
        %806 = vadd.xlane.f32.xlu0 %v805
        %v807 = vpop.xlane.xlu0 %806
        %v808 = vsel %vm560, %v740, 0.0
        %809 = vadd.xlane.f32.xlu0 %v808
        %v810 = vpop.xlane.xlu0 %809
        %v811 = vsel %vm560, %v741, 0.0
        %812 = vadd.xlane.f32.xlu0 %v811
        %v813 = vpop.xlane.xlu0 %812
        %v814 = vsel %vm560, %v742, 0.0
        %815 = vadd.xlane.f32.xlu0 %v814
        %v816 = vpop.xlane.xlu0 %815
        %v817 = vsel %vm560, %v743, 0.0
        %818 = vadd.xlane.f32.xlu0 %v817
        %v819 = vpop.xlane.xlu0 %818
        %v820 = vsel %vm560, %v744, 0.0
        %821 = vadd.xlane.f32.xlu0 %v820
        %v822 = vpop.xlane.xlu0 %821
        %v823 = vsel %vm560, %v745, 0.0
        %824 = vadd.xlane.f32.xlu0 %v823
        %v825 = vpop.xlane.xlu0 %824
        %v826 = vsel %vm560, %v746, 0.0
        %827 = vadd.xlane.f32.xlu0 %v826
        %v828 = vpop.xlane.xlu0 %827
        %v829 = vsel %vm560, %v747, 0.0
        %830 = vadd.xlane.f32.xlu0 %v829
        %v831 = vpop.xlane.xlu0 %830
        %v832 = vsel %vm560, %v748, 0.0
        %833 = vadd.xlane.f32.xlu0 %v832
        %v834 = vpop.xlane.xlu0 %833
        %v835 = vsel %vm560, %v749, 0.0
        %836 = vadd.xlane.f32.xlu0 %v835
        %v837 = vpop.xlane.xlu0 %836
        %v838 = vsel %vm560, %v750, 0.0
        %839 = vadd.xlane.f32.xlu0 %v838
        %v840 = vpop.xlane.xlu0 %839
        %v841 = vsel %vm560, %v751, 0.0
        %842 = vadd.xlane.f32.xlu0 %v841
        %v843 = vpop.xlane.xlu0 %842
        %v844 = vsel %vm560, %v752, 0.0
        %845 = vadd.xlane.f32.xlu0 %v844
        %v846 = vpop.xlane.xlu0 %845
        %v847 = vsel %vm560, %v753, 0.0
        %848 = vadd.xlane.f32.xlu0 %v847
        %v849 = vpop.xlane.xlu0 %848
        %v850 = vmul.f32 %v756, %v657
        %v851 = vmul.f32 %v759, %v657
        %v852 = vmul.f32 %v762, %v657
        %v853 = vmul.f32 %v765, %v657
        %v854 = vmul.f32 %v768, %v657
        %v855 = vmul.f32 %v771, %v657
        %v856 = vmul.f32 %v774, %v657
        %v857 = vmul.f32 %v777, %v657
        %v858 = vmul.f32 %v780, %v657
        %v859 = vmul.f32 %v783, %v657
        %v860 = vmul.f32 %v786, %v657
        %v861 = vmul.f32 %v789, %v657
        %v862 = vmul.f32 %v792, %v657
        %v863 = vmul.f32 %v795, %v657
        %v864 = vmul.f32 %v798, %v657
        %v865 = vmul.f32 %v801, %v657
        %v866 = vmul.f32 %v804, %v657
        %v867 = vmul.f32 %v807, %v657
        %v868 = vmul.f32 %v810, %v657
        %v869 = vmul.f32 %v813, %v657
        %v870 = vmul.f32 %v816, %v657
        %v871 = vmul.f32 %v819, %v657
        %v872 = vmul.f32 %v822, %v657
        %v873 = vmul.f32 %v825, %v657
        %v874 = vmul.f32 %v828, %v657
        %v875 = vmul.f32 %v831, %v657
        %v876 = vmul.f32 %v834, %v657
        %v877 = vmul.f32 %v837, %v657
        %v878 = vmul.f32 %v840, %v657
        %v879 = vmul.f32 %v843, %v657
        %v880 = vmul.f32 %v846, %v657
        %v881 = vmul.f32 %v849, %v657
        %v882 = vadd.f32 %v850, 1e-05
        %v883 = vadd.f32 %v851, 1e-05
        %v884 = vadd.f32 %v852, 1e-05
        %v885 = vadd.f32 %v853, 1e-05
        %v886 = vadd.f32 %v854, 1e-05
        %v887 = vadd.f32 %v855, 1e-05
        %v888 = vadd.f32 %v856, 1e-05
        %v889 = vadd.f32 %v857, 1e-05
        %v890 = vadd.f32 %v858, 1e-05
        %v891 = vadd.f32 %v859, 1e-05
        %v892 = vadd.f32 %v860, 1e-05
        %v893 = vadd.f32 %v861, 1e-05
        %v894 = vadd.f32 %v862, 1e-05
        %v895 = vadd.f32 %v863, 1e-05
        %v896 = vadd.f32 %v864, 1e-05
        %v897 = vadd.f32 %v865, 1e-05
        %v898 = vadd.f32 %v866, 1e-05
        %v899 = vadd.f32 %v867, 1e-05
        %v900 = vadd.f32 %v868, 1e-05
        %v901 = vadd.f32 %v869, 1e-05
        %v902 = vadd.f32 %v870, 1e-05
        %v903 = vadd.f32 %v871, 1e-05
        %v904 = vadd.f32 %v872, 1e-05
        %v905 = vadd.f32 %v873, 1e-05
        %v906 = vadd.f32 %v874, 1e-05
        %v907 = vadd.f32 %v875, 1e-05
        %v908 = vadd.f32 %v876, 1e-05
        %v909 = vadd.f32 %v877, 1e-05
        %v910 = vadd.f32 %v878, 1e-05
        %v911 = vadd.f32 %v879, 1e-05
        %v912 = vadd.f32 %v880, 1e-05
        %v913 = vadd.f32 %v881, 1e-05
        %v914 = vrsqrt.pop %v882
        %v915 = vrsqrt.pop %v883
        %v916 = vrsqrt.pop %v884
        %v917 = vrsqrt.pop %v885
        %v918 = vrsqrt.pop %v886
        %v919 = vrsqrt.pop %v887
        %v920 = vrsqrt.pop %v888
        %v921 = vrsqrt.pop %v889
        %v922 = vrsqrt.pop %v890
        %v923 = vrsqrt.pop %v891
        %v924 = vrsqrt.pop %v892
        %v925 = vrsqrt.pop %v893
        %v926 = vrsqrt.pop %v894
        %v927 = vrsqrt.pop %v895
        %v928 = vrsqrt.pop %v896
        %v929 = vrsqrt.pop %v897
        %v930 = vrsqrt.pop %v898
        %v931 = vrsqrt.pop %v899
        %v932 = vrsqrt.pop %v900
        %v933 = vrsqrt.pop %v901
        %v934 = vrsqrt.pop %v902
        %v935 = vrsqrt.pop %v903
        %v936 = vrsqrt.pop %v904
        %v937 = vrsqrt.pop %v905
        %v938 = vrsqrt.pop %v906
        %v939 = vrsqrt.pop %v907
        %v940 = vrsqrt.pop %v908
        %v941 = vrsqrt.pop %v909
        %v942 = vrsqrt.pop %v910
        %v943 = vrsqrt.pop %v911
        %v944 = vrsqrt.pop %v912
        %v945 = vrsqrt.pop %v913
        %v946 = vmul.f32 %v690, %v914
        %v947 = vmul.f32 %v691, %v915
        %v948 = vmul.f32 %v692, %v916
        %v949 = vmul.f32 %v693, %v917
        %v950 = vmul.f32 %v694, %v918
        %v951 = vmul.f32 %v695, %v919
        %v952 = vmul.f32 %v696, %v920
        %v953 = vmul.f32 %v697, %v921
        %v954 = vmul.f32 %v698, %v922
        %v955 = vmul.f32 %v699, %v923
        %v956 = vmul.f32 %v700, %v924
        %v957 = vmul.f32 %v701, %v925
        %v958 = vmul.f32 %v702, %v926
        %v959 = vmul.f32 %v703, %v927
        %v960 = vmul.f32 %v704, %v928
        %v961 = vmul.f32 %v705, %v929
        %v962 = vmul.f32 %v706, %v930
        %v963 = vmul.f32 %v707, %v931
        %v964 = vmul.f32 %v708, %v932
        %v965 = vmul.f32 %v709, %v933
        %v966 = vmul.f32 %v710, %v934
        %v967 = vmul.f32 %v711, %v935
        %v968 = vmul.f32 %v712, %v936
        %v969 = vmul.f32 %v713, %v937
        %v970 = vmul.f32 %v714, %v938
        %v971 = vmul.f32 %v715, %v939
        %v972 = vmul.f32 %v716, %v940
        %v973 = vmul.f32 %v717, %v941
        %v974 = vmul.f32 %v718, %v942
        %v975 = vmul.f32 %v719, %v943
        %v976 = vmul.f32 %v720, %v944
        %v977 = vmul.f32 %v721, %v945
        %v978 = vlaneseq
        %v979 = vshrl.u32 %v978, 7
        %v980 = vsub.s32 1, %v979
        %v981 = vrot.slane %v259, %v980
        %v982 = vmul.f32 %v946, %v981
        %v983 = vmul.f32 %v947, %v981
        %v984 = vmul.f32 %v948, %v981
        %v985 = vmul.f32 %v949, %v981
        %v986 = vmul.f32 %v950, %v981
        %v987 = vmul.f32 %v951, %v981
        %v988 = vmul.f32 %v952, %v981
        %v989 = vmul.f32 %v953, %v981
        %v990 = vmul.f32 %v954, %v981
        %v991 = vmul.f32 %v955, %v981
        %v992 = vmul.f32 %v956, %v981
        %v993 = vmul.f32 %v957, %v981
        %v994 = vmul.f32 %v958, %v981
        %v995 = vmul.f32 %v959, %v981
        %v996 = vmul.f32 %v960, %v981
        %v997 = vmul.f32 %v961, %v981
        %v998 = vmul.f32 %v962, %v981
        %v999 = vmul.f32 %v963, %v981
        %v1000 = vmul.f32 %v964, %v981
        %v1001 = vmul.f32 %v965, %v981
        %v1002 = vmul.f32 %v966, %v981
        %v1003 = vmul.f32 %v967, %v981
        %v1004 = vmul.f32 %v968, %v981
        %v1005 = vmul.f32 %v969, %v981
        %v1006 = vmul.f32 %v970, %v981
        %v1007 = vmul.f32 %v971, %v981
        %v1008 = vmul.f32 %v972, %v981
        %v1009 = vmul.f32 %v973, %v981
        %v1010 = vmul.f32 %v974, %v981
        %v1011 = vmul.f32 %v975, %v981
        %v1012 = vmul.f32 %v976, %v981
        %v1013 = vmul.f32 %v977, %v981
        %v1014 = vlaneseq
        %v1015 = vshrl.u32 %v1014, 7
        %v1016 = vsub.s32 2, %v1015
        %v1017 = vrot.slane %v259, %v1016
        %v1018 = vadd.f32 %v982, %v1017
        %v1019 = vadd.f32 %v983, %v1017
        %v1020 = vadd.f32 %v984, %v1017
        %v1021 = vadd.f32 %v985, %v1017
        %v1022 = vadd.f32 %v986, %v1017
        %v1023 = vadd.f32 %v987, %v1017
        %v1024 = vadd.f32 %v988, %v1017
        %v1025 = vadd.f32 %v989, %v1017
        %v1026 = vadd.f32 %v990, %v1017
        %v1027 = vadd.f32 %v991, %v1017
        %v1028 = vadd.f32 %v992, %v1017
        %v1029 = vadd.f32 %v993, %v1017
        %v1030 = vadd.f32 %v994, %v1017
        %v1031 = vadd.f32 %v995, %v1017
        %v1032 = vadd.f32 %v996, %v1017
        %v1033 = vadd.f32 %v997, %v1017
        %v1034 = vadd.f32 %v998, %v1017
        %v1035 = vadd.f32 %v999, %v1017
        %v1036 = vadd.f32 %v1000, %v1017
        %v1037 = vadd.f32 %v1001, %v1017
        %v1038 = vadd.f32 %v1002, %v1017
        %v1039 = vadd.f32 %v1003, %v1017
        %v1040 = vadd.f32 %v1004, %v1017
        %v1041 = vadd.f32 %v1005, %v1017
        %v1042 = vadd.f32 %v1006, %v1017
        %v1043 = vadd.f32 %v1007, %v1017
        %v1044 = vadd.f32 %v1008, %v1017
        %v1045 = vadd.f32 %v1009, %v1017
        %v1046 = vadd.f32 %v1010, %v1017
        %v1047 = vadd.f32 %v1011, %v1017
        %v1048 = vadd.f32 %v1012, %v1017
        %v1049 = vadd.f32 %v1013, %v1017
        %v1050 = vmax.f32 %v1018, 0.0
        %v1051 = vmax.f32 %v1019, 0.0
        %v1052 = vmax.f32 %v1020, 0.0
        %v1053 = vmax.f32 %v1021, 0.0
        %v1054 = vmax.f32 %v1022, 0.0
        %v1055 = vmax.f32 %v1023, 0.0
        %v1056 = vmax.f32 %v1024, 0.0
        %v1057 = vmax.f32 %v1025, 0.0
        %v1058 = vmax.f32 %v1026, 0.0
        %v1059 = vmax.f32 %v1027, 0.0
        %v1060 = vmax.f32 %v1028, 0.0
        %v1061 = vmax.f32 %v1029, 0.0
        %v1062 = vmax.f32 %v1030, 0.0
        %v1063 = vmax.f32 %v1031, 0.0
        %v1064 = vmax.f32 %v1032, 0.0
        %v1065 = vmax.f32 %v1033, 0.0
        %v1066 = vmax.f32 %v1034, 0.0
        %v1067 = vmax.f32 %v1035, 0.0
        %v1068 = vmax.f32 %v1036, 0.0
        %v1069 = vmax.f32 %v1037, 0.0
        %v1070 = vmax.f32 %v1038, 0.0
        %v1071 = vmax.f32 %v1039, 0.0
        %v1072 = vmax.f32 %v1040, 0.0
        %v1073 = vmax.f32 %v1041, 0.0
        %v1074 = vmax.f32 %v1042, 0.0
        %v1075 = vmax.f32 %v1043, 0.0
        %v1076 = vmax.f32 %v1044, 0.0
        %v1077 = vmax.f32 %v1045, 0.0
        %v1078 = vmax.f32 %v1046, 0.0
        %v1079 = vmax.f32 %v1047, 0.0
        %v1080 = vmax.f32 %v1048, 0.0
        %v1081 = vmax.f32 %v1049, 0.0
        %v1082 = vpack.c.bf16 %v1051, %v1050
        %v1083 = vpack.c.bf16 %v1053, %v1052
        %v1084 = vpack.c.bf16 %v1055, %v1054
        %v1085 = vpack.c.bf16 %v1057, %v1056
        %v1086 = vpack.c.bf16 %v1059, %v1058
        %v1087 = vpack.c.bf16 %v1061, %v1060
        %v1088 = vpack.c.bf16 %v1063, %v1062
        %v1089 = vpack.c.bf16 %v1065, %v1064
        %v1090 = vpack.c.bf16 %v1067, %v1066
        %v1091 = vpack.c.bf16 %v1069, %v1068
        %v1092 = vpack.c.bf16 %v1071, %v1070
        %v1093 = vpack.c.bf16 %v1073, %v1072
        %v1094 = vpack.c.bf16 %v1075, %v1074
        %v1095 = vpack.c.bf16 %v1077, %v1076
        %v1096 = vpack.c.bf16 %v1079, %v1078
        %v1097 = vpack.c.bf16 %v1081, %v1080
        %v1098 = vld [vmem:[%s2] sm:$0xf]
        %v1099 = vld [vmem:[%s2 + $0x4] sm:$0xf]
        %v1100 = vld [vmem:[%s2 + $0x8] sm:$0xf]
        %v1101 = vld [vmem:[%s2 + $0xc] sm:$0xf]
        %v1102 = vlaneseq
        %v1103 = vshrl.u32 %v1102, 7
        %v1104 = vsub.s32 3, %v1103
        %v1105 = vrot.slane %v259, %v1104
        %v1110 = vunpack.c.l.b16 %v1098
        %v1111 = vunpack.c.l.b16 %v1099
        %v1112 = vunpack.c.l.b16 %v1100
        %v1113 = vunpack.c.l.b16 %v1101
        %v1114 = vpack.c.b16 %v1111, %v1110
        %v1115 = vpack.c.b16 %v1113, %v1112
        %v1119 = vsel %vm560, %v1082, 0
        %v1122 = vsel %vm560, %v1083, 0
        %v1125 = vsel %vm560, %v1084, 0
        %v1128 = vsel %vm560, %v1085, 0
        %v1131 = vsel %vm560, %v1086, 0
        %v1134 = vsel %vm560, %v1087, 0
        %v1137 = vsel %vm560, %v1088, 0
        %v1140 = vsel %vm560, %v1089, 0
        %v1143 = vsel %vm560, %v1090, 0
        %v1146 = vsel %vm560, %v1091, 0
        %v1149 = vsel %vm560, %v1092, 0
        %v1152 = vsel %vm560, %v1093, 0
        %v1155 = vsel %vm560, %v1094, 0
        %v1158 = vsel %vm560, %v1095, 0
        %v1161 = vsel %vm560, %v1096, 0
        %v1164 = vsel %vm560, %v1097, 0
        %1166 = vmatprep.subr.bf16.mxu0 0
        %1167 = vmatpush1.bf16.msra.mxu0 %v1114
        %1168 = vmatprep.subr.bf16.mxu0 0
        %1169 = vmatpush1.bf16.msra.mxu0 %v1115
        %1170 = vmatprep.subr.bf16.mxu0 0
        %1171 = vmatpush1.bf16.msra.mxu0 0
        %1172 = vmatprep.subr.bf16.mxu0 0
        %1173 = vmatpush1.bf16.msra.mxu0 0
        %1174 = vmatprep.subr.bf16.mxu0 0
        %1175 = vmatpush1.bf16.msra.mxu0 0
        %1176 = vmatprep.subr.bf16.mxu0 0
        %1177 = vmatpush1.bf16.msra.mxu0 0
        %1178 = vmatprep.subr.bf16.mxu0 0
        %1179 = vmatpush1.bf16.msra.mxu0 0
        %1180 = vmatprep.subr.bf16.mxu0 0
        %1181 = vmatpush1.bf16.msra.mxu0 0
        %1182 = vmatprep.subr.bf16.mxu0 0
        %1183 = vmatpush1.bf16.msra.mxu0 0
        %1184 = vmatprep.subr.bf16.mxu0 0
        %1185 = vmatpush1.bf16.msra.mxu0 0
        %1186 = vmatprep.subr.bf16.mxu0 0
        %1187 = vmatpush1.bf16.msra.mxu0 0
        %1188 = vmatprep.subr.bf16.mxu0 0
        %1189 = vmatpush1.bf16.msra.mxu0 0
        %1190 = vmatprep.subr.bf16.mxu0 0
        %1191 = vmatpush1.bf16.msra.mxu0 0
        %1192 = vmatprep.subr.bf16.mxu0 0
        %1193 = vmatpush1.bf16.msra.mxu0 0
        %1194 = vmatprep.subr.bf16.mxu0 0
        %1195 = vmatpush1.bf16.msra.mxu0 0
        %1196 = vmatprep.subr.bf16.mxu0 0
        %1197 = vmatpush1.bf16.msra.mxu0 0
        %1198 = vmatprep.mubr.bf16.mxu0 0
        %1199 = vmatmul.mubr.bf16.gmra.mrb[0].mxu0 %v1119
        %v1200 = vpop.f32.mrb[0].mxu0
        %v1201 = vadd.f32 %v1105, %v1200
        %v1202 = vpop.f32.mrb[0].mxu0
        %v1203 = vpop.f32.mrb[0].mxu0
        %v1204 = vadd.f32 %v1105, %v1203
        %v1205 = vpop.f32.mrb[0].mxu0
        %1206 = vmatprep.mubr.bf16.mxu0 0
        %1207 = vmatmul.mubr.bf16.gmra.mrb[0].mxu0 %v1122
        %v1208 = vpop.f32.mrb[0].mxu0
        %v1209 = vadd.f32 %v1105, %v1208
        %v1210 = vpop.f32.mrb[0].mxu0
        %v1211 = vpop.f32.mrb[0].mxu0
        %v1212 = vadd.f32 %v1105, %v1211
        %v1213 = vpop.f32.mrb[0].mxu0
        %1214 = vmatprep.mubr.bf16.mxu0 0
        %1215 = vmatmul.mubr.bf16.gmra.mrb[0].mxu0 %v1125
        %v1216 = vpop.f32.mrb[0].mxu0
        %v1217 = vadd.f32 %v1105, %v1216
        %v1218 = vpop.f32.mrb[0].mxu0
        %v1219 = vpop.f32.mrb[0].mxu0
        %v1220 = vadd.f32 %v1105, %v1219
        %v1221 = vpop.f32.mrb[0].mxu0
        %1222 = vmatprep.mubr.bf16.mxu0 0
        %1223 = vmatmul.mubr.bf16.gmra.mrb[0].mxu0 %v1128
        %v1224 = vpop.f32.mrb[0].mxu0
        %v1225 = vadd.f32 %v1105, %v1224
        %v1226 = vpop.f32.mrb[0].mxu0
        %v1227 = vpop.f32.mrb[0].mxu0
        %v1228 = vadd.f32 %v1105, %v1227
        %v1229 = vpop.f32.mrb[0].mxu0
        %1230 = vmatprep.mubr.bf16.mxu0 0
        %1231 = vmatmul.mubr.bf16.gmra.mrb[0].mxu0 %v1131
        %v1232 = vpop.f32.mrb[0].mxu0
        %v1233 = vadd.f32 %v1105, %v1232
        %v1234 = vpop.f32.mrb[0].mxu0
        %v1235 = vpop.f32.mrb[0].mxu0
        %v1236 = vadd.f32 %v1105, %v1235
        %v1237 = vpop.f32.mrb[0].mxu0
        %1238 = vmatprep.mubr.bf16.mxu0 0
        %1239 = vmatmul.mubr.bf16.gmra.mrb[0].mxu0 %v1134
        %v1240 = vpop.f32.mrb[0].mxu0
        %v1241 = vadd.f32 %v1105, %v1240
        %v1242 = vpop.f32.mrb[0].mxu0
        %v1243 = vpop.f32.mrb[0].mxu0
        %v1244 = vadd.f32 %v1105, %v1243
        %v1245 = vpop.f32.mrb[0].mxu0
        %1246 = vmatprep.mubr.bf16.mxu0 0
        %1247 = vmatmul.mubr.bf16.gmra.mrb[0].mxu0 %v1137
        %v1248 = vpop.f32.mrb[0].mxu0
        %v1249 = vadd.f32 %v1105, %v1248
        %v1250 = vpop.f32.mrb[0].mxu0
        %v1251 = vpop.f32.mrb[0].mxu0
        %v1252 = vadd.f32 %v1105, %v1251
        %v1253 = vpop.f32.mrb[0].mxu0
        %1254 = vmatprep.mubr.bf16.mxu0 0
        %1255 = vmatmul.mubr.bf16.gmra.mrb[0].mxu0 %v1140
        %v1256 = vpop.f32.mrb[0].mxu0
        %v1257 = vadd.f32 %v1105, %v1256
        %v1258 = vpop.f32.mrb[0].mxu0
        %v1259 = vpop.f32.mrb[0].mxu0
        %v1260 = vadd.f32 %v1105, %v1259
        %v1261 = vpop.f32.mrb[0].mxu0
        %1262 = vmatprep.mubr.bf16.mxu0 0
        %1263 = vmatmul.mubr.bf16.gmra.mrb[0].mxu0 %v1143
        %v1264 = vpop.f32.mrb[0].mxu0
        %v1265 = vadd.f32 %v1105, %v1264
        %v1266 = vpop.f32.mrb[0].mxu0
        %v1267 = vpop.f32.mrb[0].mxu0
        %v1268 = vadd.f32 %v1105, %v1267
        %v1269 = vpop.f32.mrb[0].mxu0
        %1270 = vmatprep.mubr.bf16.mxu0 0
        %1271 = vmatmul.mubr.bf16.gmra.mrb[0].mxu0 %v1146
        %v1272 = vpop.f32.mrb[0].mxu0
        %v1273 = vadd.f32 %v1105, %v1272
        %v1274 = vpop.f32.mrb[0].mxu0
        %v1275 = vpop.f32.mrb[0].mxu0
        %v1276 = vadd.f32 %v1105, %v1275
        %v1277 = vpop.f32.mrb[0].mxu0
        %1278 = vmatprep.mubr.bf16.mxu0 0
        %1279 = vmatmul.mubr.bf16.gmra.mrb[0].mxu0 %v1149
        %v1280 = vpop.f32.mrb[0].mxu0
        %v1281 = vadd.f32 %v1105, %v1280
        %v1282 = vpop.f32.mrb[0].mxu0
        %v1283 = vpop.f32.mrb[0].mxu0
        %v1284 = vadd.f32 %v1105, %v1283
        %v1285 = vpop.f32.mrb[0].mxu0
        %1286 = vmatprep.mubr.bf16.mxu0 0
        %1287 = vmatmul.mubr.bf16.gmra.mrb[0].mxu0 %v1152
        %v1288 = vpop.f32.mrb[0].mxu0
        %v1289 = vadd.f32 %v1105, %v1288
        %v1290 = vpop.f32.mrb[0].mxu0
        %v1291 = vpop.f32.mrb[0].mxu0
        %v1292 = vadd.f32 %v1105, %v1291
        %v1293 = vpop.f32.mrb[0].mxu0
        %1294 = vmatprep.mubr.bf16.mxu0 0
        %1295 = vmatmul.mubr.bf16.gmra.mrb[0].mxu0 %v1155
        %v1296 = vpop.f32.mrb[0].mxu0
        %v1297 = vadd.f32 %v1105, %v1296
        %v1298 = vpop.f32.mrb[0].mxu0
        %v1299 = vpop.f32.mrb[0].mxu0
        %v1300 = vadd.f32 %v1105, %v1299
        %v1301 = vpop.f32.mrb[0].mxu0
        %1302 = vmatprep.mubr.bf16.mxu0 0
        %1303 = vmatmul.mubr.bf16.gmra.mrb[0].mxu0 %v1158
        %v1304 = vpop.f32.mrb[0].mxu0
        %v1305 = vadd.f32 %v1105, %v1304
        %v1306 = vpop.f32.mrb[0].mxu0
        %v1307 = vpop.f32.mrb[0].mxu0
        %v1308 = vadd.f32 %v1105, %v1307
        %v1309 = vpop.f32.mrb[0].mxu0
        %1310 = vmatprep.mubr.bf16.mxu0 0
        %1311 = vmatmul.mubr.bf16.gmra.mrb[0].mxu0 %v1161
        %v1312 = vpop.f32.mrb[0].mxu0
        %v1313 = vadd.f32 %v1105, %v1312
        %v1314 = vpop.f32.mrb[0].mxu0
        %v1315 = vpop.f32.mrb[0].mxu0
        %v1316 = vadd.f32 %v1105, %v1315
        %v1317 = vpop.f32.mrb[0].mxu0
        %1318 = vmatprep.mubr.bf16.mxu0 0
        %1319 = vmatmul.mubr.bf16.gmra.mrb[0].mxu0 %v1164
        %v1320 = vpop.f32.mrb[0].mxu0
        %v1321 = vadd.f32 %v1105, %v1320
        %v1322 = vpop.f32.mrb[0].mxu0
        %v1323 = vpop.f32.mrb[0].mxu0
        %v1324 = vadd.f32 %v1105, %v1323
        %v1325 = vpop.f32.mrb[0].mxu0
        %1326 = vdwg.mxu0
        %vm1327 = vcmask 523264
        %v1328 = vsel %vm1327, %v1201, 0.0
        %1329 = vadd.xlane.f32.xlu0 %v1328
        %v1330 = vpop.xlane.xlu0 %1329
        %v1331 = vsel %vm1327, %v1204, 0.0
        %1332 = vadd.xlane.f32.xlu0 %v1331
        %v1333 = vpop.xlane.xlu0 %1332
        %v1334 = vsel %vm1327, %v1209, 0.0
        %1335 = vadd.xlane.f32.xlu0 %v1334
        %v1336 = vpop.xlane.xlu0 %1335
        %v1337 = vsel %vm1327, %v1212, 0.0
        %1338 = vadd.xlane.f32.xlu0 %v1337
        %v1339 = vpop.xlane.xlu0 %1338
        %v1340 = vsel %vm1327, %v1217, 0.0
        %1341 = vadd.xlane.f32.xlu0 %v1340
        %v1342 = vpop.xlane.xlu0 %1341
        %v1343 = vsel %vm1327, %v1220, 0.0
        %1344 = vadd.xlane.f32.xlu0 %v1343
        %v1345 = vpop.xlane.xlu0 %1344
        %v1346 = vsel %vm1327, %v1225, 0.0
        %1347 = vadd.xlane.f32.xlu0 %v1346
        %v1348 = vpop.xlane.xlu0 %1347
        %v1349 = vsel %vm1327, %v1228, 0.0
        %1350 = vadd.xlane.f32.xlu0 %v1349
        %v1351 = vpop.xlane.xlu0 %1350
        %v1352 = vsel %vm1327, %v1233, 0.0
        %1353 = vadd.xlane.f32.xlu0 %v1352
        %v1354 = vpop.xlane.xlu0 %1353
        %v1355 = vsel %vm1327, %v1236, 0.0
        %1356 = vadd.xlane.f32.xlu0 %v1355
        %v1357 = vpop.xlane.xlu0 %1356
        %v1358 = vsel %vm1327, %v1241, 0.0
        %1359 = vadd.xlane.f32.xlu0 %v1358
        %v1360 = vpop.xlane.xlu0 %1359
        %v1361 = vsel %vm1327, %v1244, 0.0
        %1362 = vadd.xlane.f32.xlu0 %v1361
        %v1363 = vpop.xlane.xlu0 %1362
        %v1364 = vsel %vm1327, %v1249, 0.0
        %1365 = vadd.xlane.f32.xlu0 %v1364
        %v1366 = vpop.xlane.xlu0 %1365
        %v1367 = vsel %vm1327, %v1252, 0.0
        %1368 = vadd.xlane.f32.xlu0 %v1367
        %v1369 = vpop.xlane.xlu0 %1368
        %v1370 = vsel %vm1327, %v1257, 0.0
        %1371 = vadd.xlane.f32.xlu0 %v1370
        %v1372 = vpop.xlane.xlu0 %1371
        %v1373 = vsel %vm1327, %v1260, 0.0
        %1374 = vadd.xlane.f32.xlu0 %v1373
        %v1375 = vpop.xlane.xlu0 %1374
        %v1376 = vsel %vm1327, %v1265, 0.0
        %1377 = vadd.xlane.f32.xlu0 %v1376
        %v1378 = vpop.xlane.xlu0 %1377
        %v1379 = vsel %vm1327, %v1268, 0.0
        %1380 = vadd.xlane.f32.xlu0 %v1379
        %v1381 = vpop.xlane.xlu0 %1380
        %v1382 = vsel %vm1327, %v1273, 0.0
        %1383 = vadd.xlane.f32.xlu0 %v1382
        %v1384 = vpop.xlane.xlu0 %1383
        %v1385 = vsel %vm1327, %v1276, 0.0
        %1386 = vadd.xlane.f32.xlu0 %v1385
        %v1387 = vpop.xlane.xlu0 %1386
        %v1388 = vsel %vm1327, %v1281, 0.0
        %1389 = vadd.xlane.f32.xlu0 %v1388
        %v1390 = vpop.xlane.xlu0 %1389
        %v1391 = vsel %vm1327, %v1284, 0.0
        %1392 = vadd.xlane.f32.xlu0 %v1391
        %v1393 = vpop.xlane.xlu0 %1392
        %v1394 = vsel %vm1327, %v1289, 0.0
        %1395 = vadd.xlane.f32.xlu0 %v1394
        %v1396 = vpop.xlane.xlu0 %1395
        %v1397 = vsel %vm1327, %v1292, 0.0
        %1398 = vadd.xlane.f32.xlu0 %v1397
        %v1399 = vpop.xlane.xlu0 %1398
        %v1400 = vsel %vm1327, %v1297, 0.0
        %1401 = vadd.xlane.f32.xlu0 %v1400
        %v1402 = vpop.xlane.xlu0 %1401
        %v1403 = vsel %vm1327, %v1300, 0.0
        %1404 = vadd.xlane.f32.xlu0 %v1403
        %v1405 = vpop.xlane.xlu0 %1404
        %v1406 = vsel %vm1327, %v1305, 0.0
        %1407 = vadd.xlane.f32.xlu0 %v1406
        %v1408 = vpop.xlane.xlu0 %1407
        %v1409 = vsel %vm1327, %v1308, 0.0
        %1410 = vadd.xlane.f32.xlu0 %v1409
        %v1411 = vpop.xlane.xlu0 %1410
        %v1412 = vsel %vm1327, %v1313, 0.0
        %1413 = vadd.xlane.f32.xlu0 %v1412
        %v1414 = vpop.xlane.xlu0 %1413
        %v1415 = vsel %vm1327, %v1316, 0.0
        %1416 = vadd.xlane.f32.xlu0 %v1415
        %v1417 = vpop.xlane.xlu0 %1416
        %v1418 = vsel %vm1327, %v1321, 0.0
        %1419 = vadd.xlane.f32.xlu0 %v1418
        %v1420 = vpop.xlane.xlu0 %1419
        %v1421 = vsel %vm1327, %v1324, 0.0
        %1422 = vadd.xlane.f32.xlu0 %v1421
        %v1423 = vpop.xlane.xlu0 %1422
        %v1424 = vrcp.pop 64.0
        %v1425 = vmul.f32 %v1330, %v1424
        %v1426 = vmul.f32 %v1333, %v1424
        %v1427 = vmul.f32 %v1336, %v1424
        %v1428 = vmul.f32 %v1339, %v1424
        %v1429 = vmul.f32 %v1342, %v1424
        %v1430 = vmul.f32 %v1345, %v1424
        %v1431 = vmul.f32 %v1348, %v1424
        %v1432 = vmul.f32 %v1351, %v1424
        %v1433 = vmul.f32 %v1354, %v1424
        %v1434 = vmul.f32 %v1357, %v1424
        %v1435 = vmul.f32 %v1360, %v1424
        %v1436 = vmul.f32 %v1363, %v1424
        %v1437 = vmul.f32 %v1366, %v1424
        %v1438 = vmul.f32 %v1369, %v1424
        %v1439 = vmul.f32 %v1372, %v1424
        %v1440 = vmul.f32 %v1375, %v1424
        %v1441 = vmul.f32 %v1378, %v1424
        %v1442 = vmul.f32 %v1381, %v1424
        %v1443 = vmul.f32 %v1384, %v1424
        %v1444 = vmul.f32 %v1387, %v1424
        %v1445 = vmul.f32 %v1390, %v1424
        %v1446 = vmul.f32 %v1393, %v1424
        %v1447 = vmul.f32 %v1396, %v1424
        %v1448 = vmul.f32 %v1399, %v1424
        %v1449 = vmul.f32 %v1402, %v1424
        %v1450 = vmul.f32 %v1405, %v1424
        %v1451 = vmul.f32 %v1408, %v1424
        %v1452 = vmul.f32 %v1411, %v1424
        %v1453 = vmul.f32 %v1414, %v1424
        %v1454 = vmul.f32 %v1417, %v1424
        %v1455 = vmul.f32 %v1420, %v1424
        %v1456 = vmul.f32 %v1423, %v1424
        %v1457 = vsub.f32 %v1201, %v1425
        %v1458 = vsub.f32 %v1204, %v1426
        %v1459 = vsub.f32 %v1209, %v1427
        %v1460 = vsub.f32 %v1212, %v1428
        %v1461 = vsub.f32 %v1217, %v1429
        %v1462 = vsub.f32 %v1220, %v1430
        %v1463 = vsub.f32 %v1225, %v1431
        %v1464 = vsub.f32 %v1228, %v1432
        %v1465 = vsub.f32 %v1233, %v1433
        %v1466 = vsub.f32 %v1236, %v1434
        %v1467 = vsub.f32 %v1241, %v1435
        %v1468 = vsub.f32 %v1244, %v1436
        %v1469 = vsub.f32 %v1249, %v1437
        %v1470 = vsub.f32 %v1252, %v1438
        %v1471 = vsub.f32 %v1257, %v1439
        %v1472 = vsub.f32 %v1260, %v1440
        %v1473 = vsub.f32 %v1265, %v1441
        %v1474 = vsub.f32 %v1268, %v1442
        %v1475 = vsub.f32 %v1273, %v1443
        %v1476 = vsub.f32 %v1276, %v1444
        %v1477 = vsub.f32 %v1281, %v1445
        %v1478 = vsub.f32 %v1284, %v1446
        %v1479 = vsub.f32 %v1289, %v1447
        %v1480 = vsub.f32 %v1292, %v1448
        %v1481 = vsub.f32 %v1297, %v1449
        %v1482 = vsub.f32 %v1300, %v1450
        %v1483 = vsub.f32 %v1305, %v1451
        %v1484 = vsub.f32 %v1308, %v1452
        %v1485 = vsub.f32 %v1313, %v1453
        %v1486 = vsub.f32 %v1316, %v1454
        %v1487 = vsub.f32 %v1321, %v1455
        %v1488 = vsub.f32 %v1324, %v1456
        %v1489 = vmul.f32 %v1457, %v1457
        %v1490 = vmul.f32 %v1458, %v1458
        %v1491 = vmul.f32 %v1459, %v1459
        %v1492 = vmul.f32 %v1460, %v1460
        %v1493 = vmul.f32 %v1461, %v1461
        %v1494 = vmul.f32 %v1462, %v1462
        %v1495 = vmul.f32 %v1463, %v1463
        %v1496 = vmul.f32 %v1464, %v1464
        %v1497 = vmul.f32 %v1465, %v1465
        %v1498 = vmul.f32 %v1466, %v1466
        %v1499 = vmul.f32 %v1467, %v1467
        %v1500 = vmul.f32 %v1468, %v1468
        %v1501 = vmul.f32 %v1469, %v1469
        %v1502 = vmul.f32 %v1470, %v1470
        %v1503 = vmul.f32 %v1471, %v1471
        %v1504 = vmul.f32 %v1472, %v1472
        %v1505 = vmul.f32 %v1473, %v1473
        %v1506 = vmul.f32 %v1474, %v1474
        %v1507 = vmul.f32 %v1475, %v1475
        %v1508 = vmul.f32 %v1476, %v1476
        %v1509 = vmul.f32 %v1477, %v1477
        %v1510 = vmul.f32 %v1478, %v1478
        %v1511 = vmul.f32 %v1479, %v1479
        %v1512 = vmul.f32 %v1480, %v1480
        %v1513 = vmul.f32 %v1481, %v1481
        %v1514 = vmul.f32 %v1482, %v1482
        %v1515 = vmul.f32 %v1483, %v1483
        %v1516 = vmul.f32 %v1484, %v1484
        %v1517 = vmul.f32 %v1485, %v1485
        %v1518 = vmul.f32 %v1486, %v1486
        %v1519 = vmul.f32 %v1487, %v1487
        %v1520 = vmul.f32 %v1488, %v1488
        %v1521 = vsel %vm1327, %v1489, 0.0
        %1522 = vadd.xlane.f32.xlu0 %v1521
        %v1523 = vpop.xlane.xlu0 %1522
        %v1524 = vsel %vm1327, %v1490, 0.0
        %1525 = vadd.xlane.f32.xlu0 %v1524
        %v1526 = vpop.xlane.xlu0 %1525
        %v1527 = vsel %vm1327, %v1491, 0.0
        %1528 = vadd.xlane.f32.xlu0 %v1527
        %v1529 = vpop.xlane.xlu0 %1528
        %v1530 = vsel %vm1327, %v1492, 0.0
        %1531 = vadd.xlane.f32.xlu0 %v1530
        %v1532 = vpop.xlane.xlu0 %1531
        %v1533 = vsel %vm1327, %v1493, 0.0
        %1534 = vadd.xlane.f32.xlu0 %v1533
        %v1535 = vpop.xlane.xlu0 %1534
        %v1536 = vsel %vm1327, %v1494, 0.0
        %1537 = vadd.xlane.f32.xlu0 %v1536
        %v1538 = vpop.xlane.xlu0 %1537
        %v1539 = vsel %vm1327, %v1495, 0.0
        %1540 = vadd.xlane.f32.xlu0 %v1539
        %v1541 = vpop.xlane.xlu0 %1540
        %v1542 = vsel %vm1327, %v1496, 0.0
        %1543 = vadd.xlane.f32.xlu0 %v1542
        %v1544 = vpop.xlane.xlu0 %1543
        %v1545 = vsel %vm1327, %v1497, 0.0
        %1546 = vadd.xlane.f32.xlu0 %v1545
        %v1547 = vpop.xlane.xlu0 %1546
        %v1548 = vsel %vm1327, %v1498, 0.0
        %1549 = vadd.xlane.f32.xlu0 %v1548
        %v1550 = vpop.xlane.xlu0 %1549
        %v1551 = vsel %vm1327, %v1499, 0.0
        %1552 = vadd.xlane.f32.xlu0 %v1551
        %v1553 = vpop.xlane.xlu0 %1552
        %v1554 = vsel %vm1327, %v1500, 0.0
        %1555 = vadd.xlane.f32.xlu0 %v1554
        %v1556 = vpop.xlane.xlu0 %1555
        %v1557 = vsel %vm1327, %v1501, 0.0
        %1558 = vadd.xlane.f32.xlu0 %v1557
        %v1559 = vpop.xlane.xlu0 %1558
        %v1560 = vsel %vm1327, %v1502, 0.0
        %1561 = vadd.xlane.f32.xlu0 %v1560
        %v1562 = vpop.xlane.xlu0 %1561
        %v1563 = vsel %vm1327, %v1503, 0.0
        %1564 = vadd.xlane.f32.xlu0 %v1563
        %v1565 = vpop.xlane.xlu0 %1564
        %v1566 = vsel %vm1327, %v1504, 0.0
        %1567 = vadd.xlane.f32.xlu0 %v1566
        %v1568 = vpop.xlane.xlu0 %1567
        %v1569 = vsel %vm1327, %v1505, 0.0
        %1570 = vadd.xlane.f32.xlu0 %v1569
        %v1571 = vpop.xlane.xlu0 %1570
        %v1572 = vsel %vm1327, %v1506, 0.0
        %1573 = vadd.xlane.f32.xlu0 %v1572
        %v1574 = vpop.xlane.xlu0 %1573
        %v1575 = vsel %vm1327, %v1507, 0.0
        %1576 = vadd.xlane.f32.xlu0 %v1575
        %v1577 = vpop.xlane.xlu0 %1576
        %v1578 = vsel %vm1327, %v1508, 0.0
        %1579 = vadd.xlane.f32.xlu0 %v1578
        %v1580 = vpop.xlane.xlu0 %1579
        %v1581 = vsel %vm1327, %v1509, 0.0
        %1582 = vadd.xlane.f32.xlu0 %v1581
        %v1583 = vpop.xlane.xlu0 %1582
        %v1584 = vsel %vm1327, %v1510, 0.0
        %1585 = vadd.xlane.f32.xlu0 %v1584
        %v1586 = vpop.xlane.xlu0 %1585
        %v1587 = vsel %vm1327, %v1511, 0.0
        %1588 = vadd.xlane.f32.xlu0 %v1587
        %v1589 = vpop.xlane.xlu0 %1588
        %v1590 = vsel %vm1327, %v1512, 0.0
        %1591 = vadd.xlane.f32.xlu0 %v1590
        %v1592 = vpop.xlane.xlu0 %1591
        %v1593 = vsel %vm1327, %v1513, 0.0
        %1594 = vadd.xlane.f32.xlu0 %v1593
        %v1595 = vpop.xlane.xlu0 %1594
        %v1596 = vsel %vm1327, %v1514, 0.0
        %1597 = vadd.xlane.f32.xlu0 %v1596
        %v1598 = vpop.xlane.xlu0 %1597
        %v1599 = vsel %vm1327, %v1515, 0.0
        %1600 = vadd.xlane.f32.xlu0 %v1599
        %v1601 = vpop.xlane.xlu0 %1600
        %v1602 = vsel %vm1327, %v1516, 0.0
        %1603 = vadd.xlane.f32.xlu0 %v1602
        %v1604 = vpop.xlane.xlu0 %1603
        %v1605 = vsel %vm1327, %v1517, 0.0
        %1606 = vadd.xlane.f32.xlu0 %v1605
        %v1607 = vpop.xlane.xlu0 %1606
        %v1608 = vsel %vm1327, %v1518, 0.0
        %1609 = vadd.xlane.f32.xlu0 %v1608
        %v1610 = vpop.xlane.xlu0 %1609
        %v1611 = vsel %vm1327, %v1519, 0.0
        %1612 = vadd.xlane.f32.xlu0 %v1611
        %v1613 = vpop.xlane.xlu0 %1612
        %v1614 = vsel %vm1327, %v1520, 0.0
        %1615 = vadd.xlane.f32.xlu0 %v1614
        %v1616 = vpop.xlane.xlu0 %1615
        %v1617 = vmul.f32 %v1523, %v1424
        %v1618 = vmul.f32 %v1526, %v1424
        %v1619 = vmul.f32 %v1529, %v1424
        %v1620 = vmul.f32 %v1532, %v1424
        %v1621 = vmul.f32 %v1535, %v1424
        %v1622 = vmul.f32 %v1538, %v1424
        %v1623 = vmul.f32 %v1541, %v1424
        %v1624 = vmul.f32 %v1544, %v1424
        %v1625 = vmul.f32 %v1547, %v1424
        %v1626 = vmul.f32 %v1550, %v1424
        %v1627 = vmul.f32 %v1553, %v1424
        %v1628 = vmul.f32 %v1556, %v1424
        %v1629 = vmul.f32 %v1559, %v1424
        %v1630 = vmul.f32 %v1562, %v1424
        %v1631 = vmul.f32 %v1565, %v1424
        %v1632 = vmul.f32 %v1568, %v1424
        %v1633 = vmul.f32 %v1571, %v1424
        %v1634 = vmul.f32 %v1574, %v1424
        %v1635 = vmul.f32 %v1577, %v1424
        %v1636 = vmul.f32 %v1580, %v1424
        %v1637 = vmul.f32 %v1583, %v1424
        %v1638 = vmul.f32 %v1586, %v1424
        %v1639 = vmul.f32 %v1589, %v1424
        %v1640 = vmul.f32 %v1592, %v1424
        %v1641 = vmul.f32 %v1595, %v1424
        %v1642 = vmul.f32 %v1598, %v1424
        %v1643 = vmul.f32 %v1601, %v1424
        %v1644 = vmul.f32 %v1604, %v1424
        %v1645 = vmul.f32 %v1607, %v1424
        %v1646 = vmul.f32 %v1610, %v1424
        %v1647 = vmul.f32 %v1613, %v1424
        %v1648 = vmul.f32 %v1616, %v1424
        %v1649 = vadd.f32 %v1617, 1e-05
        %v1650 = vadd.f32 %v1618, 1e-05
        %v1651 = vadd.f32 %v1619, 1e-05
        %v1652 = vadd.f32 %v1620, 1e-05
        %v1653 = vadd.f32 %v1621, 1e-05
        %v1654 = vadd.f32 %v1622, 1e-05
        %v1655 = vadd.f32 %v1623, 1e-05
        %v1656 = vadd.f32 %v1624, 1e-05
        %v1657 = vadd.f32 %v1625, 1e-05
        %v1658 = vadd.f32 %v1626, 1e-05
        %v1659 = vadd.f32 %v1627, 1e-05
        %v1660 = vadd.f32 %v1628, 1e-05
        %v1661 = vadd.f32 %v1629, 1e-05
        %v1662 = vadd.f32 %v1630, 1e-05
        %v1663 = vadd.f32 %v1631, 1e-05
        %v1664 = vadd.f32 %v1632, 1e-05
        %v1665 = vadd.f32 %v1633, 1e-05
        %v1666 = vadd.f32 %v1634, 1e-05
        %v1667 = vadd.f32 %v1635, 1e-05
        %v1668 = vadd.f32 %v1636, 1e-05
        %v1669 = vadd.f32 %v1637, 1e-05
        %v1670 = vadd.f32 %v1638, 1e-05
        %v1671 = vadd.f32 %v1639, 1e-05
        %v1672 = vadd.f32 %v1640, 1e-05
        %v1673 = vadd.f32 %v1641, 1e-05
        %v1674 = vadd.f32 %v1642, 1e-05
        %v1675 = vadd.f32 %v1643, 1e-05
        %v1676 = vadd.f32 %v1644, 1e-05
        %v1677 = vadd.f32 %v1645, 1e-05
        %v1678 = vadd.f32 %v1646, 1e-05
        %v1679 = vadd.f32 %v1647, 1e-05
        %v1680 = vadd.f32 %v1648, 1e-05
        %v1681 = vrsqrt.pop %v1649
        %v1682 = vrsqrt.pop %v1650
        %v1683 = vrsqrt.pop %v1651
        %v1684 = vrsqrt.pop %v1652
        %v1685 = vrsqrt.pop %v1653
        %v1686 = vrsqrt.pop %v1654
        %v1687 = vrsqrt.pop %v1655
        %v1688 = vrsqrt.pop %v1656
        %v1689 = vrsqrt.pop %v1657
        %v1690 = vrsqrt.pop %v1658
        %v1691 = vrsqrt.pop %v1659
        %v1692 = vrsqrt.pop %v1660
        %v1693 = vrsqrt.pop %v1661
        %v1694 = vrsqrt.pop %v1662
        %v1695 = vrsqrt.pop %v1663
        %v1696 = vrsqrt.pop %v1664
        %v1697 = vrsqrt.pop %v1665
        %v1698 = vrsqrt.pop %v1666
        %v1699 = vrsqrt.pop %v1667
        %v1700 = vrsqrt.pop %v1668
        %v1701 = vrsqrt.pop %v1669
        %v1702 = vrsqrt.pop %v1670
        %v1703 = vrsqrt.pop %v1671
        %v1704 = vrsqrt.pop %v1672
        %v1705 = vrsqrt.pop %v1673
        %v1706 = vrsqrt.pop %v1674
        %v1707 = vrsqrt.pop %v1675
        %v1708 = vrsqrt.pop %v1676
        %v1709 = vrsqrt.pop %v1677
        %v1710 = vrsqrt.pop %v1678
        %v1711 = vrsqrt.pop %v1679
        %v1712 = vrsqrt.pop %v1680
        %v1713 = vmul.f32 %v1457, %v1681
        %v1714 = vmul.f32 %v1458, %v1682
        %v1715 = vmul.f32 %v1459, %v1683
        %v1716 = vmul.f32 %v1460, %v1684
        %v1717 = vmul.f32 %v1461, %v1685
        %v1718 = vmul.f32 %v1462, %v1686
        %v1719 = vmul.f32 %v1463, %v1687
        %v1720 = vmul.f32 %v1464, %v1688
        %v1721 = vmul.f32 %v1465, %v1689
        %v1722 = vmul.f32 %v1466, %v1690
        %v1723 = vmul.f32 %v1467, %v1691
        %v1724 = vmul.f32 %v1468, %v1692
        %v1725 = vmul.f32 %v1469, %v1693
        %v1726 = vmul.f32 %v1470, %v1694
        %v1727 = vmul.f32 %v1471, %v1695
        %v1728 = vmul.f32 %v1472, %v1696
        %v1729 = vmul.f32 %v1473, %v1697
        %v1730 = vmul.f32 %v1474, %v1698
        %v1731 = vmul.f32 %v1475, %v1699
        %v1732 = vmul.f32 %v1476, %v1700
        %v1733 = vmul.f32 %v1477, %v1701
        %v1734 = vmul.f32 %v1478, %v1702
        %v1735 = vmul.f32 %v1479, %v1703
        %v1736 = vmul.f32 %v1480, %v1704
        %v1737 = vmul.f32 %v1481, %v1705
        %v1738 = vmul.f32 %v1482, %v1706
        %v1739 = vmul.f32 %v1483, %v1707
        %v1740 = vmul.f32 %v1484, %v1708
        %v1741 = vmul.f32 %v1485, %v1709
        %v1742 = vmul.f32 %v1486, %v1710
        %v1743 = vmul.f32 %v1487, %v1711
        %v1744 = vmul.f32 %v1488, %v1712
        %v1745 = vlaneseq
        %v1746 = vshrl.u32 %v1745, 7
        %v1747 = vsub.s32 4, %v1746
        %v1748 = vrot.slane %v259, %v1747
        %v1749 = vmul.f32 %v1713, %v1748
        %v1750 = vmul.f32 %v1714, %v1748
        %v1751 = vmul.f32 %v1715, %v1748
        %v1752 = vmul.f32 %v1716, %v1748
        %v1753 = vmul.f32 %v1717, %v1748
        %v1754 = vmul.f32 %v1718, %v1748
        %v1755 = vmul.f32 %v1719, %v1748
        %v1756 = vmul.f32 %v1720, %v1748
        %v1757 = vmul.f32 %v1721, %v1748
        %v1758 = vmul.f32 %v1722, %v1748
        %v1759 = vmul.f32 %v1723, %v1748
        %v1760 = vmul.f32 %v1724, %v1748
        %v1761 = vmul.f32 %v1725, %v1748
        %v1762 = vmul.f32 %v1726, %v1748
        %v1763 = vmul.f32 %v1727, %v1748
        %v1764 = vmul.f32 %v1728, %v1748
        %v1765 = vmul.f32 %v1729, %v1748
        %v1766 = vmul.f32 %v1730, %v1748
        %v1767 = vmul.f32 %v1731, %v1748
        %v1768 = vmul.f32 %v1732, %v1748
        %v1769 = vmul.f32 %v1733, %v1748
        %v1770 = vmul.f32 %v1734, %v1748
        %v1771 = vmul.f32 %v1735, %v1748
        %v1772 = vmul.f32 %v1736, %v1748
        %v1773 = vmul.f32 %v1737, %v1748
        %v1774 = vmul.f32 %v1738, %v1748
        %v1775 = vmul.f32 %v1739, %v1748
        %v1776 = vmul.f32 %v1740, %v1748
        %v1777 = vmul.f32 %v1741, %v1748
        %v1778 = vmul.f32 %v1742, %v1748
        %v1779 = vmul.f32 %v1743, %v1748
        %v1780 = vmul.f32 %v1744, %v1748
        %v1781 = vlaneseq
        %v1782 = vshrl.u32 %v1781, 7
        %v1783 = vsub.s32 5, %v1782
        %v1784 = vrot.slane %v259, %v1783
        %v1785 = vadd.f32 %v1749, %v1784
        %v1786 = vadd.f32 %v1750, %v1784
        %v1787 = vadd.f32 %v1751, %v1784
        %v1788 = vadd.f32 %v1752, %v1784
        %v1789 = vadd.f32 %v1753, %v1784
        %v1790 = vadd.f32 %v1754, %v1784
        %v1791 = vadd.f32 %v1755, %v1784
        %v1792 = vadd.f32 %v1756, %v1784
        %v1793 = vadd.f32 %v1757, %v1784
        %v1794 = vadd.f32 %v1758, %v1784
        %v1795 = vadd.f32 %v1759, %v1784
        %v1796 = vadd.f32 %v1760, %v1784
        %v1797 = vadd.f32 %v1761, %v1784
        %v1798 = vadd.f32 %v1762, %v1784
        %v1799 = vadd.f32 %v1763, %v1784
        %v1800 = vadd.f32 %v1764, %v1784
        %v1801 = vadd.f32 %v1765, %v1784
        %v1802 = vadd.f32 %v1766, %v1784
        %v1803 = vadd.f32 %v1767, %v1784
        %v1804 = vadd.f32 %v1768, %v1784
        %v1805 = vadd.f32 %v1769, %v1784
        %v1806 = vadd.f32 %v1770, %v1784
        %v1807 = vadd.f32 %v1771, %v1784
        %v1808 = vadd.f32 %v1772, %v1784
        %v1809 = vadd.f32 %v1773, %v1784
        %v1810 = vadd.f32 %v1774, %v1784
        %v1811 = vadd.f32 %v1775, %v1784
        %v1812 = vadd.f32 %v1776, %v1784
        %v1813 = vadd.f32 %v1777, %v1784
        %v1814 = vadd.f32 %v1778, %v1784
        %v1815 = vadd.f32 %v1779, %v1784
        %v1816 = vadd.f32 %v1780, %v1784
        %v1817 = vmax.f32 %v1785, 0.0
        %v1818 = vmax.f32 %v1786, 0.0
        %v1819 = vmax.f32 %v1787, 0.0
        %v1820 = vmax.f32 %v1788, 0.0
        %v1821 = vmax.f32 %v1789, 0.0
        %v1822 = vmax.f32 %v1790, 0.0
        %v1823 = vmax.f32 %v1791, 0.0
        %v1824 = vmax.f32 %v1792, 0.0
        %v1825 = vmax.f32 %v1793, 0.0
        %v1826 = vmax.f32 %v1794, 0.0
        %v1827 = vmax.f32 %v1795, 0.0
        %v1828 = vmax.f32 %v1796, 0.0
        %v1829 = vmax.f32 %v1797, 0.0
        %v1830 = vmax.f32 %v1798, 0.0
        %v1831 = vmax.f32 %v1799, 0.0
        %v1832 = vmax.f32 %v1800, 0.0
        %v1833 = vmax.f32 %v1801, 0.0
        %v1834 = vmax.f32 %v1802, 0.0
        %v1835 = vmax.f32 %v1803, 0.0
        %v1836 = vmax.f32 %v1804, 0.0
        %v1837 = vmax.f32 %v1805, 0.0
        %v1838 = vmax.f32 %v1806, 0.0
        %v1839 = vmax.f32 %v1807, 0.0
        %v1840 = vmax.f32 %v1808, 0.0
        %v1841 = vmax.f32 %v1809, 0.0
        %v1842 = vmax.f32 %v1810, 0.0
        %v1843 = vmax.f32 %v1811, 0.0
        %v1844 = vmax.f32 %v1812, 0.0
        %v1845 = vmax.f32 %v1813, 0.0
        %v1846 = vmax.f32 %v1814, 0.0
        %v1847 = vmax.f32 %v1815, 0.0
        %v1848 = vmax.f32 %v1816, 0.0
        %v1849 = vpack.c.bf16 %v1818, %v1817
        %v1850 = vpack.c.bf16 %v1820, %v1819
        %v1851 = vpack.c.bf16 %v1822, %v1821
        %v1852 = vpack.c.bf16 %v1824, %v1823
        %v1853 = vpack.c.bf16 %v1826, %v1825
        %v1854 = vpack.c.bf16 %v1828, %v1827
        %v1855 = vpack.c.bf16 %v1830, %v1829
        %v1856 = vpack.c.bf16 %v1832, %v1831
        %v1857 = vpack.c.bf16 %v1834, %v1833
        %v1858 = vpack.c.bf16 %v1836, %v1835
        %v1859 = vpack.c.bf16 %v1838, %v1837
        %v1860 = vpack.c.bf16 %v1840, %v1839
        %v1861 = vpack.c.bf16 %v1842, %v1841
        %v1862 = vpack.c.bf16 %v1844, %v1843
        %v1863 = vpack.c.bf16 %v1846, %v1845
        %v1864 = vpack.c.bf16 %v1848, %v1847
        %v1865 = vld [vmem:[%s3] sm:$0xf]
        %v1866 = vld [vmem:[%s3 + $0x4] sm:$0xf]
        %v1867 = vld [vmem:[%s3 + $0x8] sm:$0xf]
        %v1868 = vld [vmem:[%s3 + $0xc] sm:$0xf]
        %v1869 = vld [vmem:[%s3 + $0x10] sm:$0xf]
        %v1870 = vld [vmem:[%s3 + $0x14] sm:$0xf]
        %v1871 = vld [vmem:[%s3 + $0x18] sm:$0xf]
        %v1872 = vld [vmem:[%s3 + $0x1c] sm:$0xf]
        %v1873 = vlaneseq
        %v1874 = vshrl.u32 %v1873, 7
        %v1875 = vsub.s32 6, %v1874
        %v1876 = vrot.slane %v259, %v1875
        %v1885 = vunpack.c.l.b16 %v1865
        %v1886 = vunpack.c.l.b16 %v1866
        %v1887 = vunpack.c.l.b16 %v1867
        %v1888 = vunpack.c.l.b16 %v1868
        %v1889 = vunpack.c.l.b16 %v1869
        %v1890 = vunpack.c.l.b16 %v1870
        %v1891 = vunpack.c.l.b16 %v1871
        %v1892 = vunpack.c.l.b16 %v1872
        %v1893 = vpack.c.b16 %v1886, %v1885
        %v1894 = vpack.c.b16 %v1888, %v1887
        %v1895 = vpack.c.b16 %v1890, %v1889
        %v1896 = vpack.c.b16 %v1892, %v1891
        %v1902 = vsel %vm1327, %v1849, 0
        %v1905 = vsel %vm1327, %v1850, 0
        %v1908 = vsel %vm1327, %v1851, 0
        %v1911 = vsel %vm1327, %v1852, 0
        %v1914 = vsel %vm1327, %v1853, 0
        %v1917 = vsel %vm1327, %v1854, 0
        %v1920 = vsel %vm1327, %v1855, 0
        %v1923 = vsel %vm1327, %v1856, 0
        %v1926 = vsel %vm1327, %v1857, 0
        %v1929 = vsel %vm1327, %v1858, 0
        %v1932 = vsel %vm1327, %v1859, 0
        %v1935 = vsel %vm1327, %v1860, 0
        %v1938 = vsel %vm1327, %v1861, 0
        %v1941 = vsel %vm1327, %v1862, 0
        %v1944 = vsel %vm1327, %v1863, 0
        %v1947 = vsel %vm1327, %v1864, 0
        %1949 = vmatprep.subr.bf16.mxu0 0
        %1950 = vmatpush1.bf16.msra.mxu0 %v1893
        %1951 = vmatprep.subr.bf16.mxu0 0
        %1952 = vmatpush1.bf16.msra.mxu0 %v1894
        %1953 = vmatprep.subr.bf16.mxu0 0
        %1954 = vmatpush1.bf16.msra.mxu0 %v1895
        %1955 = vmatprep.subr.bf16.mxu0 0
        %1956 = vmatpush1.bf16.msra.mxu0 %v1896
        %1957 = vmatprep.subr.bf16.mxu0 0
        %1958 = vmatpush1.bf16.msra.mxu0 0
        %1959 = vmatprep.subr.bf16.mxu0 0
        %1960 = vmatpush1.bf16.msra.mxu0 0
        %1961 = vmatprep.subr.bf16.mxu0 0
        %1962 = vmatpush1.bf16.msra.mxu0 0
        %1963 = vmatprep.subr.bf16.mxu0 0
        %1964 = vmatpush1.bf16.msra.mxu0 0
        %1965 = vmatprep.subr.bf16.mxu0 0
        %1966 = vmatpush1.bf16.msra.mxu0 0
        %1967 = vmatprep.subr.bf16.mxu0 0
        %1968 = vmatpush1.bf16.msra.mxu0 0
        %1969 = vmatprep.subr.bf16.mxu0 0
        %1970 = vmatpush1.bf16.msra.mxu0 0
        %1971 = vmatprep.subr.bf16.mxu0 0
        %1972 = vmatpush1.bf16.msra.mxu0 0
        %1973 = vmatprep.subr.bf16.mxu0 0
        %1974 = vmatpush1.bf16.msra.mxu0 0
        %1975 = vmatprep.subr.bf16.mxu0 0
        %1976 = vmatpush1.bf16.msra.mxu0 0
        %1977 = vmatprep.subr.bf16.mxu0 0
        %1978 = vmatpush1.bf16.msra.mxu0 0
        %1979 = vmatprep.subr.bf16.mxu0 0
        %1980 = vmatpush1.bf16.msra.mxu0 0
        %1981 = vmatprep.mubr.bf16.mxu0 0
        %1982 = vmatmul.mubr.bf16.gmra.mrb[0].mxu0 %v1902
        %v1983 = vpop.f32.mrb[0].mxu0
        %v1984 = vadd.f32 %v1876, %v1983
        %v1985 = vpop.f32.mrb[0].mxu0
        %v1986 = vpop.f32.mrb[0].mxu0
        %v1987 = vadd.f32 %v1876, %v1986
        %v1988 = vpop.f32.mrb[0].mxu0
        %1989 = vmatprep.mubr.bf16.mxu0 0
        %1990 = vmatmul.mubr.bf16.gmra.mrb[0].mxu0 %v1905
        %v1991 = vpop.f32.mrb[0].mxu0
        %v1992 = vadd.f32 %v1876, %v1991
        %v1993 = vpop.f32.mrb[0].mxu0
        %v1994 = vpop.f32.mrb[0].mxu0
        %v1995 = vadd.f32 %v1876, %v1994
        %v1996 = vpop.f32.mrb[0].mxu0
        %1997 = vmatprep.mubr.bf16.mxu0 0
        %1998 = vmatmul.mubr.bf16.gmra.mrb[0].mxu0 %v1908
        %v1999 = vpop.f32.mrb[0].mxu0
        %v2000 = vadd.f32 %v1876, %v1999
        %v2001 = vpop.f32.mrb[0].mxu0
        %v2002 = vpop.f32.mrb[0].mxu0
        %v2003 = vadd.f32 %v1876, %v2002
        %v2004 = vpop.f32.mrb[0].mxu0
        %2005 = vmatprep.mubr.bf16.mxu0 0
        %2006 = vmatmul.mubr.bf16.gmra.mrb[0].mxu0 %v1911
        %v2007 = vpop.f32.mrb[0].mxu0
        %v2008 = vadd.f32 %v1876, %v2007
        %v2009 = vpop.f32.mrb[0].mxu0
        %v2010 = vpop.f32.mrb[0].mxu0
        %v2011 = vadd.f32 %v1876, %v2010
        %v2012 = vpop.f32.mrb[0].mxu0
        %2013 = vmatprep.mubr.bf16.mxu0 0
        %2014 = vmatmul.mubr.bf16.gmra.mrb[0].mxu0 %v1914
        %v2015 = vpop.f32.mrb[0].mxu0
        %v2016 = vadd.f32 %v1876, %v2015
        %v2017 = vpop.f32.mrb[0].mxu0
        %v2018 = vpop.f32.mrb[0].mxu0
        %v2019 = vadd.f32 %v1876, %v2018
        %v2020 = vpop.f32.mrb[0].mxu0
        %2021 = vmatprep.mubr.bf16.mxu0 0
        %2022 = vmatmul.mubr.bf16.gmra.mrb[0].mxu0 %v1917
        %v2023 = vpop.f32.mrb[0].mxu0
        %v2024 = vadd.f32 %v1876, %v2023
        %v2025 = vpop.f32.mrb[0].mxu0
        %v2026 = vpop.f32.mrb[0].mxu0
        %v2027 = vadd.f32 %v1876, %v2026
        %v2028 = vpop.f32.mrb[0].mxu0
        %2029 = vmatprep.mubr.bf16.mxu0 0
        %2030 = vmatmul.mubr.bf16.gmra.mrb[0].mxu0 %v1920
        %v2031 = vpop.f32.mrb[0].mxu0
        %v2032 = vadd.f32 %v1876, %v2031
        %v2033 = vpop.f32.mrb[0].mxu0
        %v2034 = vpop.f32.mrb[0].mxu0
        %v2035 = vadd.f32 %v1876, %v2034
        %v2036 = vpop.f32.mrb[0].mxu0
        %2037 = vmatprep.mubr.bf16.mxu0 0
        %2038 = vmatmul.mubr.bf16.gmra.mrb[0].mxu0 %v1923
        %v2039 = vpop.f32.mrb[0].mxu0
        %v2040 = vadd.f32 %v1876, %v2039
        %v2041 = vpop.f32.mrb[0].mxu0
        %v2042 = vpop.f32.mrb[0].mxu0
        %v2043 = vadd.f32 %v1876, %v2042
        %v2044 = vpop.f32.mrb[0].mxu0
        %2045 = vmatprep.mubr.bf16.mxu0 0
        %2046 = vmatmul.mubr.bf16.gmra.mrb[0].mxu0 %v1926
        %v2047 = vpop.f32.mrb[0].mxu0
        %v2048 = vadd.f32 %v1876, %v2047
        %v2049 = vpop.f32.mrb[0].mxu0
        %v2050 = vpop.f32.mrb[0].mxu0
        %v2051 = vadd.f32 %v1876, %v2050
        %v2052 = vpop.f32.mrb[0].mxu0
        %2053 = vmatprep.mubr.bf16.mxu0 0
        %2054 = vmatmul.mubr.bf16.gmra.mrb[0].mxu0 %v1929
        %v2055 = vpop.f32.mrb[0].mxu0
        %v2056 = vadd.f32 %v1876, %v2055
        %v2057 = vpop.f32.mrb[0].mxu0
        %v2058 = vpop.f32.mrb[0].mxu0
        %v2059 = vadd.f32 %v1876, %v2058
        %v2060 = vpop.f32.mrb[0].mxu0
        %2061 = vmatprep.mubr.bf16.mxu0 0
        %2062 = vmatmul.mubr.bf16.gmra.mrb[0].mxu0 %v1932
        %v2063 = vpop.f32.mrb[0].mxu0
        %v2064 = vadd.f32 %v1876, %v2063
        %v2065 = vpop.f32.mrb[0].mxu0
        %v2066 = vpop.f32.mrb[0].mxu0
        %v2067 = vadd.f32 %v1876, %v2066
        %v2068 = vpop.f32.mrb[0].mxu0
        %2069 = vmatprep.mubr.bf16.mxu0 0
        %2070 = vmatmul.mubr.bf16.gmra.mrb[0].mxu0 %v1935
        %v2071 = vpop.f32.mrb[0].mxu0
        %v2072 = vadd.f32 %v1876, %v2071
        %v2073 = vpop.f32.mrb[0].mxu0
        %v2074 = vpop.f32.mrb[0].mxu0
        %v2075 = vadd.f32 %v1876, %v2074
        %v2076 = vpop.f32.mrb[0].mxu0
        %2077 = vmatprep.mubr.bf16.mxu0 0
        %2078 = vmatmul.mubr.bf16.gmra.mrb[0].mxu0 %v1938
        %v2079 = vpop.f32.mrb[0].mxu0
        %v2080 = vadd.f32 %v1876, %v2079
        %v2081 = vpop.f32.mrb[0].mxu0
        %v2082 = vpop.f32.mrb[0].mxu0
        %v2083 = vadd.f32 %v1876, %v2082
        %v2084 = vpop.f32.mrb[0].mxu0
        %2085 = vmatprep.mubr.bf16.mxu0 0
        %2086 = vmatmul.mubr.bf16.gmra.mrb[0].mxu0 %v1941
        %v2087 = vpop.f32.mrb[0].mxu0
        %v2088 = vadd.f32 %v1876, %v2087
        %v2089 = vpop.f32.mrb[0].mxu0
        %v2090 = vpop.f32.mrb[0].mxu0
        %v2091 = vadd.f32 %v1876, %v2090
        %v2092 = vpop.f32.mrb[0].mxu0
        %2093 = vmatprep.mubr.bf16.mxu0 0
        %2094 = vmatmul.mubr.bf16.gmra.mrb[0].mxu0 %v1944
        %v2095 = vpop.f32.mrb[0].mxu0
        %v2096 = vadd.f32 %v1876, %v2095
        %v2097 = vpop.f32.mrb[0].mxu0
        %v2098 = vpop.f32.mrb[0].mxu0
        %v2099 = vadd.f32 %v1876, %v2098
        %v2100 = vpop.f32.mrb[0].mxu0
        %2101 = vmatprep.mubr.bf16.mxu0 0
        %2102 = vmatmul.mubr.bf16.gmra.mrb[0].mxu0 %v1947
        %v2103 = vpop.f32.mrb[0].mxu0
        %v2104 = vadd.f32 %v1876, %v2103
        %v2105 = vpop.f32.mrb[0].mxu0
        %v2106 = vpop.f32.mrb[0].mxu0
        %v2107 = vadd.f32 %v1876, %v2106
        %v2108 = vpop.f32.mrb[0].mxu0
        %2109 = vdwg.mxu0
        %2110 = vadd.xlane.f32.xlu0 %v1984
        %v2111 = vpop.xlane.xlu0 %2110
        %2112 = vadd.xlane.f32.xlu0 %v1987
        %v2113 = vpop.xlane.xlu0 %2112
        %2114 = vadd.xlane.f32.xlu0 %v1992
        %v2115 = vpop.xlane.xlu0 %2114
        %2116 = vadd.xlane.f32.xlu0 %v1995
        %v2117 = vpop.xlane.xlu0 %2116
        %2118 = vadd.xlane.f32.xlu0 %v2000
        %v2119 = vpop.xlane.xlu0 %2118
        %2120 = vadd.xlane.f32.xlu0 %v2003
        %v2121 = vpop.xlane.xlu0 %2120
        %2122 = vadd.xlane.f32.xlu0 %v2008
        %v2123 = vpop.xlane.xlu0 %2122
        %2124 = vadd.xlane.f32.xlu0 %v2011
        %v2125 = vpop.xlane.xlu0 %2124
        %2126 = vadd.xlane.f32.xlu0 %v2016
        %v2127 = vpop.xlane.xlu0 %2126
        %2128 = vadd.xlane.f32.xlu0 %v2019
        %v2129 = vpop.xlane.xlu0 %2128
        %2130 = vadd.xlane.f32.xlu0 %v2024
        %v2131 = vpop.xlane.xlu0 %2130
        %2132 = vadd.xlane.f32.xlu0 %v2027
        %v2133 = vpop.xlane.xlu0 %2132
        %2134 = vadd.xlane.f32.xlu0 %v2032
        %v2135 = vpop.xlane.xlu0 %2134
        %2136 = vadd.xlane.f32.xlu0 %v2035
        %v2137 = vpop.xlane.xlu0 %2136
        %2138 = vadd.xlane.f32.xlu0 %v2040
        %v2139 = vpop.xlane.xlu0 %2138
        %2140 = vadd.xlane.f32.xlu0 %v2043
        %v2141 = vpop.xlane.xlu0 %2140
        %2142 = vadd.xlane.f32.xlu0 %v2048
        %v2143 = vpop.xlane.xlu0 %2142
        %2144 = vadd.xlane.f32.xlu0 %v2051
        %v2145 = vpop.xlane.xlu0 %2144
        %2146 = vadd.xlane.f32.xlu0 %v2056
        %v2147 = vpop.xlane.xlu0 %2146
        %2148 = vadd.xlane.f32.xlu0 %v2059
        %v2149 = vpop.xlane.xlu0 %2148
        %2150 = vadd.xlane.f32.xlu0 %v2064
        %v2151 = vpop.xlane.xlu0 %2150
        %2152 = vadd.xlane.f32.xlu0 %v2067
        %v2153 = vpop.xlane.xlu0 %2152
        %2154 = vadd.xlane.f32.xlu0 %v2072
        %v2155 = vpop.xlane.xlu0 %2154
        %2156 = vadd.xlane.f32.xlu0 %v2075
        %v2157 = vpop.xlane.xlu0 %2156
        %2158 = vadd.xlane.f32.xlu0 %v2080
        %v2159 = vpop.xlane.xlu0 %2158
        %2160 = vadd.xlane.f32.xlu0 %v2083
        %v2161 = vpop.xlane.xlu0 %2160
        %2162 = vadd.xlane.f32.xlu0 %v2088
        %v2163 = vpop.xlane.xlu0 %2162
        %2164 = vadd.xlane.f32.xlu0 %v2091
        %v2165 = vpop.xlane.xlu0 %2164
        %2166 = vadd.xlane.f32.xlu0 %v2096
        %v2167 = vpop.xlane.xlu0 %2166
        %2168 = vadd.xlane.f32.xlu0 %v2099
        %v2169 = vpop.xlane.xlu0 %2168
        %2170 = vadd.xlane.f32.xlu0 %v2104
        %v2171 = vpop.xlane.xlu0 %2170
        %2172 = vadd.xlane.f32.xlu0 %v2107
        %v2173 = vpop.xlane.xlu0 %2172
        %v2174 = vrcp.pop 128.0
        %v2175 = vmul.f32 %v2111, %v2174
        %v2176 = vmul.f32 %v2113, %v2174
        %v2177 = vmul.f32 %v2115, %v2174
        %v2178 = vmul.f32 %v2117, %v2174
        %v2179 = vmul.f32 %v2119, %v2174
        %v2180 = vmul.f32 %v2121, %v2174
        %v2181 = vmul.f32 %v2123, %v2174
        %v2182 = vmul.f32 %v2125, %v2174
        %v2183 = vmul.f32 %v2127, %v2174
        %v2184 = vmul.f32 %v2129, %v2174
        %v2185 = vmul.f32 %v2131, %v2174
        %v2186 = vmul.f32 %v2133, %v2174
        %v2187 = vmul.f32 %v2135, %v2174
        %v2188 = vmul.f32 %v2137, %v2174
        %v2189 = vmul.f32 %v2139, %v2174
        %v2190 = vmul.f32 %v2141, %v2174
        %v2191 = vmul.f32 %v2143, %v2174
        %v2192 = vmul.f32 %v2145, %v2174
        %v2193 = vmul.f32 %v2147, %v2174
        %v2194 = vmul.f32 %v2149, %v2174
        %v2195 = vmul.f32 %v2151, %v2174
        %v2196 = vmul.f32 %v2153, %v2174
        %v2197 = vmul.f32 %v2155, %v2174
        %v2198 = vmul.f32 %v2157, %v2174
        %v2199 = vmul.f32 %v2159, %v2174
        %v2200 = vmul.f32 %v2161, %v2174
        %v2201 = vmul.f32 %v2163, %v2174
        %v2202 = vmul.f32 %v2165, %v2174
        %v2203 = vmul.f32 %v2167, %v2174
        %v2204 = vmul.f32 %v2169, %v2174
        %v2205 = vmul.f32 %v2171, %v2174
        %v2206 = vmul.f32 %v2173, %v2174
        %v2207 = vsub.f32 %v1984, %v2175
        %v2208 = vsub.f32 %v1987, %v2176
        %v2209 = vsub.f32 %v1992, %v2177
        %v2210 = vsub.f32 %v1995, %v2178
        %v2211 = vsub.f32 %v2000, %v2179
        %v2212 = vsub.f32 %v2003, %v2180
        %v2213 = vsub.f32 %v2008, %v2181
        %v2214 = vsub.f32 %v2011, %v2182
        %v2215 = vsub.f32 %v2016, %v2183
        %v2216 = vsub.f32 %v2019, %v2184
        %v2217 = vsub.f32 %v2024, %v2185
        %v2218 = vsub.f32 %v2027, %v2186
        %v2219 = vsub.f32 %v2032, %v2187
        %v2220 = vsub.f32 %v2035, %v2188
        %v2221 = vsub.f32 %v2040, %v2189
        %v2222 = vsub.f32 %v2043, %v2190
        %v2223 = vsub.f32 %v2048, %v2191
        %v2224 = vsub.f32 %v2051, %v2192
        %v2225 = vsub.f32 %v2056, %v2193
        %v2226 = vsub.f32 %v2059, %v2194
        %v2227 = vsub.f32 %v2064, %v2195
        %v2228 = vsub.f32 %v2067, %v2196
        %v2229 = vsub.f32 %v2072, %v2197
        %v2230 = vsub.f32 %v2075, %v2198
        %v2231 = vsub.f32 %v2080, %v2199
        %v2232 = vsub.f32 %v2083, %v2200
        %v2233 = vsub.f32 %v2088, %v2201
        %v2234 = vsub.f32 %v2091, %v2202
        %v2235 = vsub.f32 %v2096, %v2203
        %v2236 = vsub.f32 %v2099, %v2204
        %v2237 = vsub.f32 %v2104, %v2205
        %v2238 = vsub.f32 %v2107, %v2206
        %v2239 = vmul.f32 %v2207, %v2207
        %v2240 = vmul.f32 %v2208, %v2208
        %v2241 = vmul.f32 %v2209, %v2209
        %v2242 = vmul.f32 %v2210, %v2210
        %v2243 = vmul.f32 %v2211, %v2211
        %v2244 = vmul.f32 %v2212, %v2212
        %v2245 = vmul.f32 %v2213, %v2213
        %v2246 = vmul.f32 %v2214, %v2214
        %v2247 = vmul.f32 %v2215, %v2215
        %v2248 = vmul.f32 %v2216, %v2216
        %v2249 = vmul.f32 %v2217, %v2217
        %v2250 = vmul.f32 %v2218, %v2218
        %v2251 = vmul.f32 %v2219, %v2219
        %v2252 = vmul.f32 %v2220, %v2220
        %v2253 = vmul.f32 %v2221, %v2221
        %v2254 = vmul.f32 %v2222, %v2222
        %v2255 = vmul.f32 %v2223, %v2223
        %v2256 = vmul.f32 %v2224, %v2224
        %v2257 = vmul.f32 %v2225, %v2225
        %v2258 = vmul.f32 %v2226, %v2226
        %v2259 = vmul.f32 %v2227, %v2227
        %v2260 = vmul.f32 %v2228, %v2228
        %v2261 = vmul.f32 %v2229, %v2229
        %v2262 = vmul.f32 %v2230, %v2230
        %v2263 = vmul.f32 %v2231, %v2231
        %v2264 = vmul.f32 %v2232, %v2232
        %v2265 = vmul.f32 %v2233, %v2233
        %v2266 = vmul.f32 %v2234, %v2234
        %v2267 = vmul.f32 %v2235, %v2235
        %v2268 = vmul.f32 %v2236, %v2236
        %v2269 = vmul.f32 %v2237, %v2237
        %v2270 = vmul.f32 %v2238, %v2238
        %2271 = vadd.xlane.f32.xlu0 %v2239
        %v2272 = vpop.xlane.xlu0 %2271
        %2273 = vadd.xlane.f32.xlu0 %v2240
        %v2274 = vpop.xlane.xlu0 %2273
        %2275 = vadd.xlane.f32.xlu0 %v2241
        %v2276 = vpop.xlane.xlu0 %2275
        %2277 = vadd.xlane.f32.xlu0 %v2242
        %v2278 = vpop.xlane.xlu0 %2277
        %2279 = vadd.xlane.f32.xlu0 %v2243
        %v2280 = vpop.xlane.xlu0 %2279
        %2281 = vadd.xlane.f32.xlu0 %v2244
        %v2282 = vpop.xlane.xlu0 %2281
        %2283 = vadd.xlane.f32.xlu0 %v2245
        %v2284 = vpop.xlane.xlu0 %2283
        %2285 = vadd.xlane.f32.xlu0 %v2246
        %v2286 = vpop.xlane.xlu0 %2285
        %2287 = vadd.xlane.f32.xlu0 %v2247
        %v2288 = vpop.xlane.xlu0 %2287
        %2289 = vadd.xlane.f32.xlu0 %v2248
        %v2290 = vpop.xlane.xlu0 %2289
        %2291 = vadd.xlane.f32.xlu0 %v2249
        %v2292 = vpop.xlane.xlu0 %2291
        %2293 = vadd.xlane.f32.xlu0 %v2250
        %v2294 = vpop.xlane.xlu0 %2293
        %2295 = vadd.xlane.f32.xlu0 %v2251
        %v2296 = vpop.xlane.xlu0 %2295
        %2297 = vadd.xlane.f32.xlu0 %v2252
        %v2298 = vpop.xlane.xlu0 %2297
        %2299 = vadd.xlane.f32.xlu0 %v2253
        %v2300 = vpop.xlane.xlu0 %2299
        %2301 = vadd.xlane.f32.xlu0 %v2254
        %v2302 = vpop.xlane.xlu0 %2301
        %2303 = vadd.xlane.f32.xlu0 %v2255
        %v2304 = vpop.xlane.xlu0 %2303
        %2305 = vadd.xlane.f32.xlu0 %v2256
        %v2306 = vpop.xlane.xlu0 %2305
        %2307 = vadd.xlane.f32.xlu0 %v2257
        %v2308 = vpop.xlane.xlu0 %2307
        %2309 = vadd.xlane.f32.xlu0 %v2258
        %v2310 = vpop.xlane.xlu0 %2309
        %2311 = vadd.xlane.f32.xlu0 %v2259
        %v2312 = vpop.xlane.xlu0 %2311
        %2313 = vadd.xlane.f32.xlu0 %v2260
        %v2314 = vpop.xlane.xlu0 %2313
        %2315 = vadd.xlane.f32.xlu0 %v2261
        %v2316 = vpop.xlane.xlu0 %2315
        %2317 = vadd.xlane.f32.xlu0 %v2262
        %v2318 = vpop.xlane.xlu0 %2317
        %2319 = vadd.xlane.f32.xlu0 %v2263
        %v2320 = vpop.xlane.xlu0 %2319
        %2321 = vadd.xlane.f32.xlu0 %v2264
        %v2322 = vpop.xlane.xlu0 %2321
        %2323 = vadd.xlane.f32.xlu0 %v2265
        %v2324 = vpop.xlane.xlu0 %2323
        %2325 = vadd.xlane.f32.xlu0 %v2266
        %v2326 = vpop.xlane.xlu0 %2325
        %2327 = vadd.xlane.f32.xlu0 %v2267
        %v2328 = vpop.xlane.xlu0 %2327
        %2329 = vadd.xlane.f32.xlu0 %v2268
        %v2330 = vpop.xlane.xlu0 %2329
        %2331 = vadd.xlane.f32.xlu0 %v2269
        %v2332 = vpop.xlane.xlu0 %2331
        %2333 = vadd.xlane.f32.xlu0 %v2270
        %v2334 = vpop.xlane.xlu0 %2333
        %v2335 = vmul.f32 %v2272, %v2174
        %v2336 = vmul.f32 %v2274, %v2174
        %v2337 = vmul.f32 %v2276, %v2174
        %v2338 = vmul.f32 %v2278, %v2174
        %v2339 = vmul.f32 %v2280, %v2174
        %v2340 = vmul.f32 %v2282, %v2174
        %v2341 = vmul.f32 %v2284, %v2174
        %v2342 = vmul.f32 %v2286, %v2174
        %v2343 = vmul.f32 %v2288, %v2174
        %v2344 = vmul.f32 %v2290, %v2174
        %v2345 = vmul.f32 %v2292, %v2174
        %v2346 = vmul.f32 %v2294, %v2174
        %v2347 = vmul.f32 %v2296, %v2174
        %v2348 = vmul.f32 %v2298, %v2174
        %v2349 = vmul.f32 %v2300, %v2174
        %v2350 = vmul.f32 %v2302, %v2174
        %v2351 = vmul.f32 %v2304, %v2174
        %v2352 = vmul.f32 %v2306, %v2174
        %v2353 = vmul.f32 %v2308, %v2174
        %v2354 = vmul.f32 %v2310, %v2174
        %v2355 = vmul.f32 %v2312, %v2174
        %v2356 = vmul.f32 %v2314, %v2174
        %v2357 = vmul.f32 %v2316, %v2174
        %v2358 = vmul.f32 %v2318, %v2174
        %v2359 = vmul.f32 %v2320, %v2174
        %v2360 = vmul.f32 %v2322, %v2174
        %v2361 = vmul.f32 %v2324, %v2174
        %v2362 = vmul.f32 %v2326, %v2174
        %v2363 = vmul.f32 %v2328, %v2174
        %v2364 = vmul.f32 %v2330, %v2174
        %v2365 = vmul.f32 %v2332, %v2174
        %v2366 = vmul.f32 %v2334, %v2174
        %v2367 = vadd.f32 %v2335, 1e-05
        %v2368 = vadd.f32 %v2336, 1e-05
        %v2369 = vadd.f32 %v2337, 1e-05
        %v2370 = vadd.f32 %v2338, 1e-05
        %v2371 = vadd.f32 %v2339, 1e-05
        %v2372 = vadd.f32 %v2340, 1e-05
        %v2373 = vadd.f32 %v2341, 1e-05
        %v2374 = vadd.f32 %v2342, 1e-05
        %v2375 = vadd.f32 %v2343, 1e-05
        %v2376 = vadd.f32 %v2344, 1e-05
        %v2377 = vadd.f32 %v2345, 1e-05
        %v2378 = vadd.f32 %v2346, 1e-05
        %v2379 = vadd.f32 %v2347, 1e-05
        %v2380 = vadd.f32 %v2348, 1e-05
        %v2381 = vadd.f32 %v2349, 1e-05
        %v2382 = vadd.f32 %v2350, 1e-05
        %v2383 = vadd.f32 %v2351, 1e-05
        %v2384 = vadd.f32 %v2352, 1e-05
        %v2385 = vadd.f32 %v2353, 1e-05
        %v2386 = vadd.f32 %v2354, 1e-05
        %v2387 = vadd.f32 %v2355, 1e-05
        %v2388 = vadd.f32 %v2356, 1e-05
        %v2389 = vadd.f32 %v2357, 1e-05
        %v2390 = vadd.f32 %v2358, 1e-05
        %v2391 = vadd.f32 %v2359, 1e-05
        %v2392 = vadd.f32 %v2360, 1e-05
        %v2393 = vadd.f32 %v2361, 1e-05
        %v2394 = vadd.f32 %v2362, 1e-05
        %v2395 = vadd.f32 %v2363, 1e-05
        %v2396 = vadd.f32 %v2364, 1e-05
        %v2397 = vadd.f32 %v2365, 1e-05
        %v2398 = vadd.f32 %v2366, 1e-05
        %v2399 = vrsqrt.pop %v2367
        %v2400 = vrsqrt.pop %v2368
        %v2401 = vrsqrt.pop %v2369
        %v2402 = vrsqrt.pop %v2370
        %v2403 = vrsqrt.pop %v2371
        %v2404 = vrsqrt.pop %v2372
        %v2405 = vrsqrt.pop %v2373
        %v2406 = vrsqrt.pop %v2374
        %v2407 = vrsqrt.pop %v2375
        %v2408 = vrsqrt.pop %v2376
        %v2409 = vrsqrt.pop %v2377
        %v2410 = vrsqrt.pop %v2378
        %v2411 = vrsqrt.pop %v2379
        %v2412 = vrsqrt.pop %v2380
        %v2413 = vrsqrt.pop %v2381
        %v2414 = vrsqrt.pop %v2382
        %v2415 = vrsqrt.pop %v2383
        %v2416 = vrsqrt.pop %v2384
        %v2417 = vrsqrt.pop %v2385
        %v2418 = vrsqrt.pop %v2386
        %v2419 = vrsqrt.pop %v2387
        %v2420 = vrsqrt.pop %v2388
        %v2421 = vrsqrt.pop %v2389
        %v2422 = vrsqrt.pop %v2390
        %v2423 = vrsqrt.pop %v2391
        %v2424 = vrsqrt.pop %v2392
        %v2425 = vrsqrt.pop %v2393
        %v2426 = vrsqrt.pop %v2394
        %v2427 = vrsqrt.pop %v2395
        %v2428 = vrsqrt.pop %v2396
        %v2429 = vrsqrt.pop %v2397
        %v2430 = vrsqrt.pop %v2398
        %v2431 = vmul.f32 %v2207, %v2399
        %v2432 = vmul.f32 %v2208, %v2400
        %v2433 = vmul.f32 %v2209, %v2401
        %v2434 = vmul.f32 %v2210, %v2402
        %v2435 = vmul.f32 %v2211, %v2403
        %v2436 = vmul.f32 %v2212, %v2404
        %v2437 = vmul.f32 %v2213, %v2405
        %v2438 = vmul.f32 %v2214, %v2406
        %v2439 = vmul.f32 %v2215, %v2407
        %v2440 = vmul.f32 %v2216, %v2408
        %v2441 = vmul.f32 %v2217, %v2409
        %v2442 = vmul.f32 %v2218, %v2410
        %v2443 = vmul.f32 %v2219, %v2411
        %v2444 = vmul.f32 %v2220, %v2412
        %v2445 = vmul.f32 %v2221, %v2413
        %v2446 = vmul.f32 %v2222, %v2414
        %v2447 = vmul.f32 %v2223, %v2415
        %v2448 = vmul.f32 %v2224, %v2416
        %v2449 = vmul.f32 %v2225, %v2417
        %v2450 = vmul.f32 %v2226, %v2418
        %v2451 = vmul.f32 %v2227, %v2419
        %v2452 = vmul.f32 %v2228, %v2420
        %v2453 = vmul.f32 %v2229, %v2421
        %v2454 = vmul.f32 %v2230, %v2422
        %v2455 = vmul.f32 %v2231, %v2423
        %v2456 = vmul.f32 %v2232, %v2424
        %v2457 = vmul.f32 %v2233, %v2425
        %v2458 = vmul.f32 %v2234, %v2426
        %v2459 = vmul.f32 %v2235, %v2427
        %v2460 = vmul.f32 %v2236, %v2428
        %v2461 = vmul.f32 %v2237, %v2429
        %v2462 = vmul.f32 %v2238, %v2430
        %v2463 = vlaneseq
        %v2464 = vshrl.u32 %v2463, 7
        %v2465 = vsub.s32 7, %v2464
        %v2466 = vrot.slane %v259, %v2465
        %v2467 = vmul.f32 %v2431, %v2466
        %v2468 = vmul.f32 %v2432, %v2466
        %v2469 = vmul.f32 %v2433, %v2466
        %v2470 = vmul.f32 %v2434, %v2466
        %v2471 = vmul.f32 %v2435, %v2466
        %v2472 = vmul.f32 %v2436, %v2466
        %v2473 = vmul.f32 %v2437, %v2466
        %v2474 = vmul.f32 %v2438, %v2466
        %v2475 = vmul.f32 %v2439, %v2466
        %v2476 = vmul.f32 %v2440, %v2466
        %v2477 = vmul.f32 %v2441, %v2466
        %v2478 = vmul.f32 %v2442, %v2466
        %v2479 = vmul.f32 %v2443, %v2466
        %v2480 = vmul.f32 %v2444, %v2466
        %v2481 = vmul.f32 %v2445, %v2466
        %v2482 = vmul.f32 %v2446, %v2466
        %v2483 = vmul.f32 %v2447, %v2466
        %v2484 = vmul.f32 %v2448, %v2466
        %v2485 = vmul.f32 %v2449, %v2466
        %v2486 = vmul.f32 %v2450, %v2466
        %v2487 = vmul.f32 %v2451, %v2466
        %v2488 = vmul.f32 %v2452, %v2466
        %v2489 = vmul.f32 %v2453, %v2466
        %v2490 = vmul.f32 %v2454, %v2466
        %v2491 = vmul.f32 %v2455, %v2466
        %v2492 = vmul.f32 %v2456, %v2466
        %v2493 = vmul.f32 %v2457, %v2466
        %v2494 = vmul.f32 %v2458, %v2466
        %v2495 = vmul.f32 %v2459, %v2466
        %v2496 = vmul.f32 %v2460, %v2466
        %v2497 = vmul.f32 %v2461, %v2466
        %v2498 = vmul.f32 %v2462, %v2466
        %v2499 = vlaneseq
        %v2500 = vshrl.u32 %v2499, 7
        %v2501 = vsub.s32 0, %v2500
        %v2502 = vrot.slane %v260, %v2501
        %v2503 = vadd.f32 %v2467, %v2502
        %v2504 = vadd.f32 %v2468, %v2502
        %v2505 = vadd.f32 %v2469, %v2502
        %v2506 = vadd.f32 %v2470, %v2502
        %v2507 = vadd.f32 %v2471, %v2502
        %v2508 = vadd.f32 %v2472, %v2502
        %v2509 = vadd.f32 %v2473, %v2502
        %v2510 = vadd.f32 %v2474, %v2502
        %v2511 = vadd.f32 %v2475, %v2502
        %v2512 = vadd.f32 %v2476, %v2502
        %v2513 = vadd.f32 %v2477, %v2502
        %v2514 = vadd.f32 %v2478, %v2502
        %v2515 = vadd.f32 %v2479, %v2502
        %v2516 = vadd.f32 %v2480, %v2502
        %v2517 = vadd.f32 %v2481, %v2502
        %v2518 = vadd.f32 %v2482, %v2502
        %v2519 = vadd.f32 %v2483, %v2502
        %v2520 = vadd.f32 %v2484, %v2502
        %v2521 = vadd.f32 %v2485, %v2502
        %v2522 = vadd.f32 %v2486, %v2502
        %v2523 = vadd.f32 %v2487, %v2502
        %v2524 = vadd.f32 %v2488, %v2502
        %v2525 = vadd.f32 %v2489, %v2502
        %v2526 = vadd.f32 %v2490, %v2502
        %v2527 = vadd.f32 %v2491, %v2502
        %v2528 = vadd.f32 %v2492, %v2502
        %v2529 = vadd.f32 %v2493, %v2502
        %v2530 = vadd.f32 %v2494, %v2502
        %v2531 = vadd.f32 %v2495, %v2502
        %v2532 = vadd.f32 %v2496, %v2502
        %v2533 = vadd.f32 %v2497, %v2502
        %v2534 = vadd.f32 %v2498, %v2502
        %2535 = vst [vmem:[%s218] sm:$0xff] %v2503
        %2536 = vst [vmem:[%s218 + $0x8] sm:$0xff] %v2504
        %2537 = vst [vmem:[%s218 + $0x10] sm:$0xff] %v2505
        %2538 = vst [vmem:[%s218 + $0x18] sm:$0xff] %v2506
        %2539 = vst [vmem:[%s218 + $0x20] sm:$0xff] %v2507
        %2540 = vst [vmem:[%s218 + $0x28] sm:$0xff] %v2508
        %2541 = vst [vmem:[%s218 + $0x30] sm:$0xff] %v2509
        %2542 = vst [vmem:[%s218 + $0x38] sm:$0xff] %v2510
        %2543 = vst [vmem:[%s218 + $0x40] sm:$0xff] %v2511
        %2544 = vst [vmem:[%s218 + $0x48] sm:$0xff] %v2512
        %2545 = vst [vmem:[%s218 + $0x50] sm:$0xff] %v2513
        %2546 = vst [vmem:[%s218 + $0x58] sm:$0xff] %v2514
        %2547 = vst [vmem:[%s218 + $0x60] sm:$0xff] %v2515
        %2548 = vst [vmem:[%s218 + $0x68] sm:$0xff] %v2516
        %2549 = vst [vmem:[%s218 + $0x70] sm:$0xff] %v2517
        %2550 = vst [vmem:[%s218 + $0x78] sm:$0xff] %v2518
        %2551 = vst [vmem:[%s218 + $0x80] sm:$0xff] %v2519
        %2552 = vst [vmem:[%s218 + $0x88] sm:$0xff] %v2520
        %2553 = vst [vmem:[%s218 + $0x90] sm:$0xff] %v2521
        %2554 = vst [vmem:[%s218 + $0x98] sm:$0xff] %v2522
        %2555 = vst [vmem:[%s218 + $0xa0] sm:$0xff] %v2523
        %2556 = vst [vmem:[%s218 + $0xa8] sm:$0xff] %v2524
        %2557 = vst [vmem:[%s218 + $0xb0] sm:$0xff] %v2525
        %2558 = vst [vmem:[%s218 + $0xb8] sm:$0xff] %v2526
        %2559 = vst [vmem:[%s218 + $0xc0] sm:$0xff] %v2527
        %2560 = vst [vmem:[%s218 + $0xc8] sm:$0xff] %v2528
        %2561 = vst [vmem:[%s218 + $0xd0] sm:$0xff] %v2529
        %2562 = vst [vmem:[%s218 + $0xd8] sm:$0xff] %v2530
        %2563 = vst [vmem:[%s218 + $0xe0] sm:$0xff] %v2531
        %2564 = vst [vmem:[%s218 + $0xe8] sm:$0xff] %v2532
        %2565 = vst [vmem:[%s218 + $0xf0] sm:$0xff] %v2533
        %2566 = vst [vmem:[%s218 + $0xf8] sm:$0xff] %v2534
        %s2567 = sand.u32 %s137, 1
        %s2568 = scalar_lea.sflag [#allocation3], %s2567
        %s2569 = sand.u32 %s137, 1
        %s2570 = smul.addr %s2569, 256
        %s2571 = scalar_lea.vmem [#allocation2], %s2570
        // Predicated region
        $region41: #{single_input_embedding_forward.1} parent=39 // pred_check
          %p2572 = pneg %p147
        $region42: #{single_input_embedding_forward.1} parent=39 // pred_check_branch
          %2574 = sbr.rel (%p2572) target = $region44
        $region43: #{single_input_embedding_forward.1} parent=39 // pred_region
          %s2575 = smul.u32 32, %s19
          %s2577 = ssub.s32 4096, 4096
          %2578 = vsyncadd %s2568, %s2577
          %s2579 = smul.addr %s2575, 128
          %s2580 = scalar_lea.hbm %s5, %s2579
          %s2581 = sshll.u32 %s2571, 4
          %s2582 = int_to_ptr.vmem [resolvable:$true] %s2581
          %2587 = dma.vmem_to_hbm [thread:$0]  %s2582, 4096, %s2580, %s2568, 128, 128, 8
        $region44: #{single_input_embedding_forward.1} parent=39 // pred_fallthru
          _
      $region40: #{single_input_embedding_forward.1} parent=5 // pred_fallthru
        _
      %p2588 = scmp.le.s32.totalorder 2, %s14
      // Predicated region
      $region45: #{single_input_embedding_forward.1} parent=5 // pred_check
        %p2589 = pneg %p2588
      $region46: #{single_input_embedding_forward.1} parent=5 // pred_check_branch
        %2591 = sbr.rel (%p2589) target = $region48
      $region47: #{single_input_embedding_forward.1} parent=5 // pred_region
        %s2592 = ssub.s32 %s14, 2
        // Predicated region
        $region49: #{single_input_embedding_forward.1} parent=47 // pred_check
          %p2593 = pneg %p153
        $region50: #{single_input_embedding_forward.1} parent=47 // pred_check_branch
          %2595 = sbr.rel (%p2593) target = $region52
        $region51: #{single_input_embedding_forward.1} parent=47 // pred_region
          %s2596 = sand.u32 %s138, 1
          %s2597 = scalar_lea.sflag [#allocation3], %s2596
          %s2598 = sand.u32 %s138, 1
          %s2599 = smul.addr %s2598, 256
          %s2600 = scalar_lea.vmem [#allocation2], %s2599
          %2601 = dma.done %s2597, 4096
        $region52: #{single_input_embedding_forward.1} parent=47 // pred_fallthru
          _
      $region48: #{single_input_embedding_forward.1} parent=5 // pred_fallthru
        _
    $region6: #{single_input_embedding_forward.1} parent=1 // loop_footer
      %s18 = sadd.s32 1, %s14
    $region7: #{single_input_embedding_forward.1} parent=1 // loop_footer_branch
      %13 = sbr.rel target = $region3
    $region8: #{single_input_embedding_forward.1} parent=1 // loop_exit
      _
    %2602 = vsyncpa [#allocation3], 1
    %s2603 = scalar_lea.sflag [#allocation3], 1
    %2604 = vsyncpa %s2603, 1

</llo_original>
